<compile_context>
chip_gen: v7x
topology: tpu7x:2x2x1
jax: 0.10.0
libtpu: 0.0.40
codegen_flags: <defaults>
</compile_context>

<pallas_src>
import functools

import jax
import jax.numpy as jnp
from jax.experimental import pallas as pl
from jax.experimental.pallas import tpu as pltpu


def _round_up(x, m):
    return ((x + m - 1) // m) * m


def _make_conv_kernel(k, stride, tr, cin_p, wc_p):
    """One grid step = TR output rows x all Cout for one batch element."""
    taps = [(dy, dx) for dy in range(k) for dx in range(k)]
    row_step = tr * stride
    aligned = (row_step % 8) == 0

    def kernel(x_ref, w_ref, b_ref, o_ref, a_scr):
        # x_ref: (1, Hp_pad, Cin_p, Wp_p) bf16 -- whole padded image (batch n),
        #        resident across row tiles (its index_map ignores the row axis).
        # w_ref: (Cout_p, k*k*Cin_p)      bf16 -- resident.
        # b_ref: (Cout_p, 1)              f32  -- resident.
        # o_ref: (1, Cout_p, TR*Wc_p)     f32  -- lane-dense output tile.
        # a_scr: (k*k*Cin_p, TR*Wc_p)     bf16 -- tap-stacked im2col operand.
        rt = pl.program_id(1)
        row0 = rt * row_step
        if aligned:
            row0 = pl.multiple_of(row0, 8)

        # Build A:
        #   A[(dy*k+dx)*Cin_p + ci, r*Wc_p + c] = Xp[row0 + r*s + dy, ci, dx + c]
        # Each (tap, row) chunk is an 8-row / 128-lane aligned store; every
        # lane of a_scr is overwritten each step (no stale/NaN reads).
        for t, (dy, dx) in enumerate(taps):
            for r in range(tr):
                v = x_ref[0, row0 + r * stride + dy, :, dx:dx + wc_p]
                a_scr[t * cin_p:(t + 1) * cin_p, r * wc_p:(r + 1) * wc_p] = v

        # Single MXU contraction over K = k*k*Cin_p (f32 accumulation).
        acc = jax.lax.dot_general(
            w_ref[...], a_scr[...],
            dimension_numbers=(((1,), (0,)), ((), ())),
            preferred_element_type=jnp.float32)
        o_ref[0, :, :] = (acc + b_ref[...]).astype(o_ref.dtype)

    return kernel


def conv_layer_forward(x, weight, bias, stride, *,
                       compute_dtype=jnp.bfloat16, out_dtype=jnp.float32):
    """ReflectionPad2d(k//2) + Conv2d(Cin, Cout, k, stride) forward.

    x:      (N, Cin, H, W)    NCHW
    weight: (Cout, Cin, k, k) PyTorch OIHW layout
    bias:   (Cout,)
    returns (N, Cout, Ho, Wo) NCHW in x.dtype
    """
    N, Cin, H, W = x.shape
    Cout, _, k, _ = weight.shape
    s = int(stride)
    p = k // 2
    Hp, Wp = H + 2 * p, W + 2 * p
    Ho = (Hp - k) // s + 1
    Wo = (Wp - k) // s + 1

    # Stride-1 column extent; rows are strided in-kernel, columns subsampled in
    # the wrapper.
    Wo1 = Wp - k + 1
    Wc_p = _round_up(Wo1, 128)            # lane-dense per-row output width
    Wp_p = _round_up(Wc_p + k - 1, 128)   # input lane pad so dx + Wc_p reads fit
    Cin_p = _round_up(Cin, 8)
    Cout_p = _round_up(Cout, 8)
    Kd = k * k * Cin_p

    # Output-row tile: big enough to amortize per-step overhead, small enough
    # that the (Cout_p, TR*Wc_p) result and the A scratch stay modest.
    TR = max(1, min(Ho, max(1, 2048 // Wc_p), 8))
    n_rt = (Ho + TR - 1) // TR
    Ho_pad = n_rt * TR
    Mt = TR * Wc_p
    Hp_pad = max(Hp, (Ho_pad - 1) * s + k)

    # Reflection pad + relayout to (N, Hp_pad, Cin_p, Wp_p) in bf16.
    # TODO(synk): this pad/transpose still costs one extra activation HBM round
    # trip; fold the reflected-row indexing into the kernel (scalar-prefetched
    # row table) or fuse the producer into the input DMA (allow_input_fusion).
    xq = jnp.pad(x.astype(compute_dtype),
                 ((0, 0), (0, 0), (p, p), (p, p)), mode="reflect")
    xq = jnp.transpose(xq, (0, 2, 1, 3))                        # (N, Hp, Cin, Wp)
    xq = jnp.pad(xq, ((0, 0), (0, Hp_pad - Hp),
                      (0, Cin_p - Cin), (0, Wp_p - Wp)))

    # Weights as (Cout_p, k*k*Cin_p); K ordered (dy, dx, ci) to match A.
    w2 = jnp.transpose(weight, (0, 2, 3, 1))                    # (Cout, k, k, Cin)
    w2 = jnp.pad(w2, ((0, Cout_p - Cout), (0, 0), (0, 0), (0, Cin_p - Cin)))
    w2 = w2.reshape(Cout_p, Kd).astype(compute_dtype)
    b2 = jnp.pad(bias, (0, Cout_p - Cout)).reshape(Cout_p, 1).astype(jnp.float32)

    kernel = _make_conv_kernel(k, s, TR, Cin_p, Wc_p)

    out_itemsize = jnp.dtype(out_dtype).itemsize
    flops = 2 * N * n_rt * Cout_p * Kd * Mt
    bytes_accessed = (xq.size * xq.dtype.itemsize
                      + w2.size * w2.dtype.itemsize
                      + b2.size * 4
                      + N * Cout_p * n_rt * Mt * out_itemsize)

    # VMEM: input image block (double-buffered) + weights + A scratch + out tile.
    vmem_est = (2 * Hp_pad * Cin_p * Wp_p * 2
                + Cout_p * Kd * 2 + Cout_p * 4
                + Kd * Mt * 2
                + 2 * Cout_p * Mt * out_itemsize)
    vmem_limit = int(min(max(2 * vmem_est, 16 * 1024 * 1024), 96 * 1024 * 1024))

    wide = pl.pallas_call(
        kernel,
        out_shape=jax.ShapeDtypeStruct((N, Cout_p, n_rt * Mt), out_dtype),
        grid=(N, n_rt),
        in_specs=[
            pl.BlockSpec((1, Hp_pad, Cin_p, Wp_p), lambda n, rt: (n, 0, 0, 0)),
            pl.BlockSpec((Cout_p, Kd), lambda n, rt: (0, 0)),
            pl.BlockSpec((Cout_p, 1), lambda n, rt: (0, 0)),
        ],
        out_specs=pl.BlockSpec((1, Cout_p, Mt), lambda n, rt: (n, 0, rt)),
        scratch_shapes=[pltpu.VMEM((Kd, Mt), compute_dtype)],
        compiler_params=pltpu.CompilerParams(
            dimension_semantics=("parallel", "parallel"),
            vmem_limit_bytes=vmem_limit),
        cost_estimate=pl.CostEstimate(
            flops=flops, transcendentals=0, bytes_accessed=bytes_accessed),
    )(xq, w2, b2)

    # (N, Cout_p, Ho_pad*Wc_p) -> (N, Cout, Ho, Wo); rows are already strided.
    out = wide.reshape(N, Cout_p, Ho_pad, Wc_p)[:, :Cout, :Ho, :]
    # TODO(synk): move the column stride in-kernel (lane-strided pl.ds reads)
    # to remove the remaining s-fold column waste.
    if s != 1:
        out = out[:, :, :, ::s]
    out = out[:, :, :, :Wo]
    return out.astype(x.dtype)


if __name__ == "__main__":
    # ConvLayer(in_channels=4, out_channels=8, kernel_size=3) on (2, 4, 16, 16),
    # checked at stride 1 and stride 2.
    # NOTE: this toy size is for correctness only; perf must be validated at
    # representative H, W, Cin, Cout (per-step overhead dominates here).
    key = jax.random.PRNGKey(0)
    kx, kw, kb = jax.random.split(key, 3)

    N, Cin, H, W = 2, 4, 16, 16
    Cout, ksz = 8, 3

    x = jax.random.normal(kx, (N, Cin, H, W), dtype=jnp.float32)
    weight = jax.random.normal(kw, (Cout, Cin, ksz, ksz), dtype=jnp.float32) * 0.1
    bias = jax.random.normal(kb, (Cout,), dtype=jnp.float32) * 0.1

    pad = ksz // 2
    xp_ref = jnp.pad(x, ((0, 0), (0, 0), (pad, pad), (pad, pad)), mode="reflect")

    for stride in (1, 2):
        fwd = jax.jit(functools.partial(conv_layer_forward, stride=stride))
        out = jax.block_until_ready(fwd(x, weight, bias))

        # Reference 1: XLA conv with the same bf16-operand / f32-accumulate
        # numerics as the kernel (tight tolerance).
        ref_bf16 = jax.lax.conv_general_dilated(
            xp_ref.astype(jnp.bfloat16), weight.astype(jnp.bfloat16),
            window_strides=(stride, stride), padding="VALID",
            dimension_numbers=("NCHW", "OIHW", "NCHW"),
            preferred_element_type=jnp.float32,
        ) + bias[None, :, None, None]
        assert out.shape == ref_bf16.shape, (stride, out.shape, ref_bf16.shape)
        assert jnp.allclose(out, ref_bf16, atol=2e-3, rtol=2e-3), (
            stride, float(jnp.max(jnp.abs(out - ref_bf16))))

        # Reference 2: full-f32 conv (loose tolerance; bounds bf16 cast error).
        ref_f32 = jax.lax.conv_general_dilated(
            xp_ref, weight, window_strides=(stride, stride), padding="VALID",
            dimension_numbers=("NCHW", "OIHW", "NCHW"),
        ) + bias[None, :, None, None]
        assert jnp.allclose(out, ref_f32, atol=1e-1, rtol=1e-1), (
            stride, float(jnp.max(jnp.abs(out - ref_f32))))

    print("KERNEL_OK")
</pallas_src>

<mosaic_0001>
module attributes {stable_mosaic.version = 11 : i64} {
  func.func @kernel(%arg0: i32, %arg1: i32, %arg2: memref<1x18x8x256xbf16, #tpu.memory_space<vmem>>, %arg3: memref<8x72xbf16, #tpu.memory_space<vmem>>, %arg4: memref<8x1xf32, #tpu.memory_space<vmem>>, %arg5: memref<1x8x1024xf32, #tpu.memory_space<vmem>>, %arg6: memref<72x1024xbf16, #tpu.memory_space<vmem>>) attributes {dimension_semantics = [#tpu.dimension_semantics<parallel>, #tpu.dimension_semantics<parallel>], iteration_bounds = array<i64: 2, 2>, scalar_prefetch = 0 : i64, scratch_operands = 1 : i64, tpu.core_type = #tpu.core_type<tc>, window_params = [{transform_indices = @transform_0, window_bounds = array<i64: 1, 18, 8, 256>}, {pipeline_mode = #tpu.pipeline_mode<synchronous>, transform_indices = @transform_1, window_bounds = array<i64: 8, 72>}, {pipeline_mode = #tpu.pipeline_mode<synchronous>, transform_indices = @transform_2, window_bounds = array<i64: 8, 1>}, {transform_indices = @transform_3, window_bounds = array<i64: 1, 8, 1024>}]} {
    %c8_i32 = arith.constant 8 : i32
    %0 = arith.muli %arg1, %c8_i32 : i32
    %1 = tpu.assume_multiple %0, 8 : i32
    %c0_i32 = arith.constant 0 : i32
    %2 = arith.addi %1, %c0_i32 : i32
    %c0_i32_0 = arith.constant 0 : i32
    %3 = arith.addi %2, %c0_i32_0 : i32
    %c0 = arith.constant 0 : index
    %4 = arith.index_cast %3 : i32 to index
    %c0_1 = arith.constant 0 : index
    %c0_2 = arith.constant 0 : index
    %5 = vector.load %arg2[%c0, %4, %c0_1, %c0_2] : memref<1x18x8x256xbf16, #tpu.memory_space<vmem>>, vector<1x1x8x128xbf16>
    %6 = vector.shape_cast %5 : vector<1x1x8x128xbf16> to vector<8x128xbf16>
    %c0_3 = arith.constant 0 : index
    %c0_4 = arith.constant 0 : index
    %7 = vector.load %arg6[%c0_3, %c0_4] : memref<72x1024xbf16, #tpu.memory_space<vmem>>, vector<8x128xbf16>
    tpu.vector_store %arg6[%c0_3, %c0_4], %6 {strides = array<i32>} : memref<72x1024xbf16, #tpu.memory_space<vmem>>, vector<8x128xbf16>,
    %c1_i32 = arith.constant 1 : i32
    %8 = arith.addi %1, %c1_i32 : i32
    %c0_i32_5 = arith.constant 0 : i32
    %9 = arith.addi %8, %c0_i32_5 : i32
    %c0_6 = arith.constant 0 : index
    %10 = arith.index_cast %9 : i32 to index
    %c0_7 = arith.constant 0 : index
    %c0_8 = arith.constant 0 : index
    %11 = vector.load %arg2[%c0_6, %10, %c0_7, %c0_8] : memref<1x18x8x256xbf16, #tpu.memory_space<vmem>>, vector<1x1x8x128xbf16>
    %12 = vector.shape_cast %11 : vector<1x1x8x128xbf16> to vector<8x128xbf16>
    %c0_9 = arith.constant 0 : index
    %c128 = arith.constant 128 : index
    %13 = vector.load %arg6[%c0_9, %c128] : memref<72x1024xbf16, #tpu.memory_space<vmem>>, vector<8x128xbf16>
    tpu.vector_store %arg6[%c0_9, %c128], %12 {strides = array<i32>} : memref<72x1024xbf16, #tpu.memory_space<vmem>>, vector<8x128xbf16>,
    %c2_i32 = arith.constant 2 : i32
    %14 = arith.addi %1, %c2_i32 : i32
    %c0_i32_10 = arith.constant 0 : i32
    %15 = arith.addi %14, %c0_i32_10 : i32
    %c0_11 = arith.constant 0 : index
    %16 = arith.index_cast %15 : i32 to index
    %c0_12 = arith.constant 0 : index
    %c0_13 = arith.constant 0 : index
    %17 = vector.load %arg2[%c0_11, %16, %c0_12, %c0_13] : memref<1x18x8x256xbf16, #tpu.memory_space<vmem>>, vector<1x1x8x128xbf16>
    %18 = vector.shape_cast %17 : vector<1x1x8x128xbf16> to vector<8x128xbf16>
    %c0_14 = arith.constant 0 : index
    %c256 = arith.constant 256 : index
    %19 = vector.load %arg6[%c0_14, %c256] : memref<72x1024xbf16, #tpu.memory_space<vmem>>, vector<8x128xbf16>
    tpu.vector_store %arg6[%c0_14, %c256], %18 {strides = array<i32>} : memref<72x1024xbf16, #tpu.memory_space<vmem>>, vector<8x128xbf16>,
    %c3_i32 = arith.constant 3 : i32
    %20 = arith.addi %1, %c3_i32 : i32
    %c0_i32_15 = arith.constant 0 : i32
    %21 = arith.addi %20, %c0_i32_15 : i32
    %c0_16 = arith.constant 0 : index
    %22 = arith.index_cast %21 : i32 to index
    %c0_17 = arith.constant 0 : index
    %c0_18 = arith.constant 0 : index
    %23 = vector.load %arg2[%c0_16, %22, %c0_17, %c0_18] : memref<1x18x8x256xbf16, #tpu.memory_space<vmem>>, vector<1x1x8x128xbf16>
    %24 = vector.shape_cast %23 : vector<1x1x8x128xbf16> to vector<8x128xbf16>
    %c0_19 = arith.constant 0 : index
    %c384 = arith.constant 384 : index
    %25 = vector.load %arg6[%c0_19, %c384] : memref<72x1024xbf16, #tpu.memory_space<vmem>>, vector<8x128xbf16>
    tpu.vector_store %arg6[%c0_19, %c384], %24 {strides = array<i32>} : memref<72x1024xbf16, #tpu.memory_space<vmem>>, vector<8x128xbf16>,
    %c4_i32 = arith.constant 4 : i32
    %26 = arith.addi %1, %c4_i32 : i32
    %c0_i32_20 = arith.constant 0 : i32
    %27 = arith.addi %26, %c0_i32_20 : i32
    %c0_21 = arith.constant 0 : index
    %28 = arith.index_cast %27 : i32 to index
    %c0_22 = arith.constant 0 : index
    %c0_23 = arith.constant 0 : index
    %29 = vector.load %arg2[%c0_21, %28, %c0_22, %c0_23] : memref<1x18x8x256xbf16, #tpu.memory_space<vmem>>, vector<1x1x8x128xbf16>
    %30 = vector.shape_cast %29 : vector<1x1x8x128xbf16> to vector<8x128xbf16>
    %c0_24 = arith.constant 0 : index
    %c512 = arith.constant 512 : index
    %31 = vector.load %arg6[%c0_24, %c512] : memref<72x1024xbf16, #tpu.memory_space<vmem>>, vector<8x128xbf16>
    tpu.vector_store %arg6[%c0_24, %c512], %30 {strides = array<i32>} : memref<72x1024xbf16, #tpu.memory_space<vmem>>, vector<8x128xbf16>,
    %c5_i32 = arith.constant 5 : i32
    %32 = arith.addi %1, %c5_i32 : i32
    %c0_i32_25 = arith.constant 0 : i32
    %33 = arith.addi %32, %c0_i32_25 : i32
    %c0_26 = arith.constant 0 : index
    %34 = arith.index_cast %33 : i32 to index
    %c0_27 = arith.constant 0 : index
    %c0_28 = arith.constant 0 : index
    %35 = vector.load %arg2[%c0_26, %34, %c0_27, %c0_28] : memref<1x18x8x256xbf16, #tpu.memory_space<vmem>>, vector<1x1x8x128xbf16>
    %36 = vector.shape_cast %35 : vector<1x1x8x128xbf16> to vector<8x128xbf16>
    %c0_29 = arith.constant 0 : index
    %c640 = arith.constant 640 : index
    %37 = vector.load %arg6[%c0_29, %c640] : memref<72x1024xbf16, #tpu.memory_space<vmem>>, vector<8x128xbf16>
    tpu.vector_store %arg6[%c0_29, %c640], %36 {strides = array<i32>} : memref<72x1024xbf16, #tpu.memory_space<vmem>>, vector<8x128xbf16>,
    %c6_i32 = arith.constant 6 : i32
    %38 = arith.addi %1, %c6_i32 : i32
    %c0_i32_30 = arith.constant 0 : i32
    %39 = arith.addi %38, %c0_i32_30 : i32
    %c0_31 = arith.constant 0 : index
    %40 = arith.index_cast %39 : i32 to index
    %c0_32 = arith.constant 0 : index
    %c0_33 = arith.constant 0 : index
    %41 = vector.load %arg2[%c0_31, %40, %c0_32, %c0_33] : memref<1x18x8x256xbf16, #tpu.memory_space<vmem>>, vector<1x1x8x128xbf16>
    %42 = vector.shape_cast %41 : vector<1x1x8x128xbf16> to vector<8x128xbf16>
    %c0_34 = arith.constant 0 : index
    %c768 = arith.constant 768 : index
    %43 = vector.load %arg6[%c0_34, %c768] : memref<72x1024xbf16, #tpu.memory_space<vmem>>, vector<8x128xbf16>
    tpu.vector_store %arg6[%c0_34, %c768], %42 {strides = array<i32>} : memref<72x1024xbf16, #tpu.memory_space<vmem>>, vector<8x128xbf16>,
    %c7_i32 = arith.constant 7 : i32
    %44 = arith.addi %1, %c7_i32 : i32
    %c0_i32_35 = arith.constant 0 : i32
    %45 = arith.addi %44, %c0_i32_35 : i32
    %c0_36 = arith.constant 0 : index
    %46 = arith.index_cast %45 : i32 to index
    %c0_37 = arith.constant 0 : index
    %c0_38 = arith.constant 0 : index
    %47 = vector.load %arg2[%c0_36, %46, %c0_37, %c0_38] : memref<1x18x8x256xbf16, #tpu.memory_space<vmem>>, vector<1x1x8x128xbf16>
    %48 = vector.shape_cast %47 : vector<1x1x8x128xbf16> to vector<8x128xbf16>
    %c0_39 = arith.constant 0 : index
    %c896 = arith.constant 896 : index
    %49 = vector.load %arg6[%c0_39, %c896] : memref<72x1024xbf16, #tpu.memory_space<vmem>>, vector<8x128xbf16>
    tpu.vector_store %arg6[%c0_39, %c896], %48 {strides = array<i32>} : memref<72x1024xbf16, #tpu.memory_space<vmem>>, vector<8x128xbf16>,
    %c0_i32_40 = arith.constant 0 : i32
    %50 = arith.addi %1, %c0_i32_40 : i32
    %c0_i32_41 = arith.constant 0 : i32
    %51 = arith.addi %50, %c0_i32_41 : i32
    %c0_42 = arith.constant 0 : index
    %52 = arith.index_cast %51 : i32 to index
    %c0_43 = arith.constant 0 : index
    %c1 = arith.constant 1 : index
    %53 = vector.load %arg2[%c0_42, %52, %c0_43, %c1] : memref<1x18x8x256xbf16, #tpu.memory_space<vmem>>, vector<1x1x8x128xbf16>
    %54 = vector.shape_cast %53 : vector<1x1x8x128xbf16> to vector<8x128xbf16>
    %c8 = arith.constant 8 : index
    %c0_44 = arith.constant 0 : index
    %55 = vector.load %arg6[%c8, %c0_44] : memref<72x1024xbf16, #tpu.memory_space<vmem>>, vector<8x128xbf16>
    tpu.vector_store %arg6[%c8, %c0_44], %54 {strides = array<i32>} : memref<72x1024xbf16, #tpu.memory_space<vmem>>, vector<8x128xbf16>,
    %c1_i32_45 = arith.constant 1 : i32
    %56 = arith.addi %1, %c1_i32_45 : i32
    %c0_i32_46 = arith.constant 0 : i32
    %57 = arith.addi %56, %c0_i32_46 : i32
    %c0_47 = arith.constant 0 : index
    %58 = arith.index_cast %57 : i32 to index
    %c0_48 = arith.constant 0 : index
    %c1_49 = arith.constant 1 : index
    %59 = vector.load %arg2[%c0_47, %58, %c0_48, %c1_49] : memref<1x18x8x256xbf16, #tpu.memory_space<vmem>>, vector<1x1x8x128xbf16>
    %60 = vector.shape_cast %59 : vector<1x1x8x128xbf16> to vector<8x128xbf16>
    %c8_50 = arith.constant 8 : index
    %c128_51 = arith.constant 128 : index
    %61 = vector.load %arg6[%c8_50, %c128_51] : memref<72x1024xbf16, #tpu.memory_space<vmem>>, vector<8x128xbf16>
    tpu.vector_store %arg6[%c8_50, %c128_51], %60 {strides = array<i32>} : memref<72x1024xbf16, #tpu.memory_space<vmem>>, vector<8x128xbf16>,
    %c2_i32_52 = arith.constant 2 : i32
    %62 = arith.addi %1, %c2_i32_52 : i32
    %c0_i32_53 = arith.constant 0 : i32
    %63 = arith.addi %62, %c0_i32_53 : i32
    %c0_54 = arith.constant 0 : index
    %64 = arith.index_cast %63 : i32 to index
    %c0_55 = arith.constant 0 : index
    %c1_56 = arith.constant 1 : index
    %65 = vector.load %arg2[%c0_54, %64, %c0_55, %c1_56] : memref<1x18x8x256xbf16, #tpu.memory_space<vmem>>, vector<1x1x8x128xbf16>
    %66 = vector.shape_cast %65 : vector<1x1x8x128xbf16> to vector<8x128xbf16>
    %c8_57 = arith.constant 8 : index
    %c256_58 = arith.constant 256 : index
    %67 = vector.load %arg6[%c8_57, %c256_58] : memref<72x1024xbf16, #tpu.memory_space<vmem>>, vector<8x128xbf16>
    tpu.vector_store %arg6[%c8_57, %c256_58], %66 {strides = array<i32>} : memref<72x1024xbf16, #tpu.memory_space<vmem>>, vector<8x128xbf16>,
    %c3_i32_59 = arith.constant 3 : i32
    %68 = arith.addi %1, %c3_i32_59 : i32
    %c0_i32_60 = arith.constant 0 : i32
    %69 = arith.addi %68, %c0_i32_60 : i32
    %c0_61 = arith.constant 0 : index
    %70 = arith.index_cast %69 : i32 to index
    %c0_62 = arith.constant 0 : index
    %c1_63 = arith.constant 1 : index
    %71 = vector.load %arg2[%c0_61, %70, %c0_62, %c1_63] : memref<1x18x8x256xbf16, #tpu.memory_space<vmem>>, vector<1x1x8x128xbf16>
    %72 = vector.shape_cast %71 : vector<1x1x8x128xbf16> to vector<8x128xbf16>
    %c8_64 = arith.constant 8 : index
    %c384_65 = arith.constant 384 : index
    %73 = vector.load %arg6[%c8_64, %c384_65] : memref<72x1024xbf16, #tpu.memory_space<vmem>>, vector<8x128xbf16>
    tpu.vector_store %arg6[%c8_64, %c384_65], %72 {strides = array<i32>} : memref<72x1024xbf16, #tpu.memory_space<vmem>>, vector<8x128xbf16>,
    %c4_i32_66 = arith.constant 4 : i32
    %74 = arith.addi %1, %c4_i32_66 : i32
    %c0_i32_67 = arith.constant 0 : i32
    %75 = arith.addi %74, %c0_i32_67 : i32
    %c0_68 = arith.constant 0 : index
    %76 = arith.index_cast %75 : i32 to index
    %c0_69 = arith.constant 0 : index
    %c1_70 = arith.constant 1 : index
    %77 = vector.load %arg2[%c0_68, %76, %c0_69, %c1_70] : memref<1x18x8x256xbf16, #tpu.memory_space<vmem>>, vector<1x1x8x128xbf16>
    %78 = vector.shape_cast %77 : vector<1x1x8x128xbf16> to vector<8x128xbf16>
    %c8_71 = arith.constant 8 : index
    %c512_72 = arith.constant 512 : index
    %79 = vector.load %arg6[%c8_71, %c512_72] : memref<72x1024xbf16, #tpu.memory_space<vmem>>, vector<8x128xbf16>
    tpu.vector_store %arg6[%c8_71, %c512_72], %78 {strides = array<i32>} : memref<72x1024xbf16, #tpu.memory_space<vmem>>, vector<8x128xbf16>,
    %c5_i32_73 = arith.constant 5 : i32
    %80 = arith.addi %1, %c5_i32_73 : i32
    %c0_i32_74 = arith.constant 0 : i32
    %81 = arith.addi %80, %c0_i32_74 : i32
    %c0_75 = arith.constant 0 : index
    %82 = arith.index_cast %81 : i32 to index
    %c0_76 = arith.constant 0 : index
    %c1_77 = arith.constant 1 : index
    %83 = vector.load %arg2[%c0_75, %82, %c0_76, %c1_77] : memref<1x18x8x256xbf16, #tpu.memory_space<vmem>>, vector<1x1x8x128xbf16>
    %84 = vector.shape_cast %83 : vector<1x1x8x128xbf16> to vector<8x128xbf16>
    %c8_78 = arith.constant 8 : index
    %c640_79 = arith.constant 640 : index
    %85 = vector.load %arg6[%c8_78, %c640_79] : memref<72x1024xbf16, #tpu.memory_space<vmem>>, vector<8x128xbf16>
    tpu.vector_store %arg6[%c8_78, %c640_79], %84 {strides = array<i32>} : memref<72x1024xbf16, #tpu.memory_space<vmem>>, vector<8x128xbf16>,
    %c6_i32_80 = arith.constant 6 : i32
    %86 = arith.addi %1, %c6_i32_80 : i32
    %c0_i32_81 = arith.constant 0 : i32
    %87 = arith.addi %86, %c0_i32_81 : i32
    %c0_82 = arith.constant 0 : index
    %88 = arith.index_cast %87 : i32 to index
    %c0_83 = arith.constant 0 : index
    %c1_84 = arith.constant 1 : index
    %89 = vector.load %arg2[%c0_82, %88, %c0_83, %c1_84] : memref<1x18x8x256xbf16, #tpu.memory_space<vmem>>, vector<1x1x8x128xbf16>
    %90 = vector.shape_cast %89 : vector<1x1x8x128xbf16> to vector<8x128xbf16>
    %c8_85 = arith.constant 8 : index
    %c768_86 = arith.constant 768 : index
    %91 = vector.load %arg6[%c8_85, %c768_86] : memref<72x1024xbf16, #tpu.memory_space<vmem>>, vector<8x128xbf16>
    tpu.vector_store %arg6[%c8_85, %c768_86], %90 {strides = array<i32>} : memref<72x1024xbf16, #tpu.memory_space<vmem>>, vector<8x128xbf16>,
    %c7_i32_87 = arith.constant 7 : i32
    %92 = arith.addi %1, %c7_i32_87 : i32
    %c0_i32_88 = arith.constant 0 : i32
    %93 = arith.addi %92, %c0_i32_88 : i32
    %c0_89 = arith.constant 0 : index
    %94 = arith.index_cast %93 : i32 to index
    %c0_90 = arith.constant 0 : index
    %c1_91 = arith.constant 1 : index
    %95 = vector.load %arg2[%c0_89, %94, %c0_90, %c1_91] : memref<1x18x8x256xbf16, #tpu.memory_space<vmem>>, vector<1x1x8x128xbf16>
    %96 = vector.shape_cast %95 : vector<1x1x8x128xbf16> to vector<8x128xbf16>
    %c8_92 = arith.constant 8 : index
    %c896_93 = arith.constant 896 : index
    %97 = vector.load %arg6[%c8_92, %c896_93] : memref<72x1024xbf16, #tpu.memory_space<vmem>>, vector<8x128xbf16>
    tpu.vector_store %arg6[%c8_92, %c896_93], %96 {strides = array<i32>} : memref<72x1024xbf16, #tpu.memory_space<vmem>>, vector<8x128xbf16>,
    %c0_i32_94 = arith.constant 0 : i32
    %98 = arith.addi %1, %c0_i32_94 : i32
    %c0_i32_95 = arith.constant 0 : i32
    %99 = arith.addi %98, %c0_i32_95 : i32
    %c0_96 = arith.constant 0 : index
    %100 = arith.index_cast %99 : i32 to index
    %c0_97 = arith.constant 0 : index
    %c2 = arith.constant 2 : index
    %101 = vector.load %arg2[%c0_96, %100, %c0_97, %c2] : memref<1x18x8x256xbf16, #tpu.memory_space<vmem>>, vector<1x1x8x128xbf16>
    %102 = vector.shape_cast %101 : vector<1x1x8x128xbf16> to vector<8x128xbf16>
    %c16 = arith.constant 16 : index
    %c0_98 = arith.constant 0 : index
    %103 = vector.load %arg6[%c16, %c0_98] : memref<72x1024xbf16, #tpu.memory_space<vmem>>, vector<8x128xbf16>
    tpu.vector_store %arg6[%c16, %c0_98], %102 {strides = array<i32>} : memref<72x1024xbf16, #tpu.memory_space<vmem>>, vector<8x128xbf16>,
    %c1_i32_99 = arith.constant 1 : i32
    %104 = arith.addi %1, %c1_i32_99 : i32
    %c0_i32_100 = arith.constant 0 : i32
    %105 = arith.addi %104, %c0_i32_100 : i32
    %c0_101 = arith.constant 0 : index
    %106 = arith.index_cast %105 : i32 to index
    %c0_102 = arith.constant 0 : index
    %c2_103 = arith.constant 2 : index
    %107 = vector.load %arg2[%c0_101, %106, %c0_102, %c2_103] : memref<1x18x8x256xbf16, #tpu.memory_space<vmem>>, vector<1x1x8x128xbf16>
    %108 = vector.shape_cast %107 : vector<1x1x8x128xbf16> to vector<8x128xbf16>
    %c16_104 = arith.constant 16 : index
    %c128_105 = arith.constant 128 : index
    %109 = vector.load %arg6[%c16_104, %c128_105] : memref<72x1024xbf16, #tpu.memory_space<vmem>>, vector<8x128xbf16>
    tpu.vector_store %arg6[%c16_104, %c128_105], %108 {strides = array<i32>} : memref<72x1024xbf16, #tpu.memory_space<vmem>>, vector<8x128xbf16>,
    %c2_i32_106 = arith.constant 2 : i32
    %110 = arith.addi %1, %c2_i32_106 : i32
    %c0_i32_107 = arith.constant 0 : i32
    %111 = arith.addi %110, %c0_i32_107 : i32
    %c0_108 = arith.constant 0 : index
    %112 = arith.index_cast %111 : i32 to index
    %c0_109 = arith.constant 0 : index
    %c2_110 = arith.constant 2 : index
    %113 = vector.load %arg2[%c0_108, %112, %c0_109, %c2_110] : memref<1x18x8x256xbf16, #tpu.memory_space<vmem>>, vector<1x1x8x128xbf16>
    %114 = vector.shape_cast %113 : vector<1x1x8x128xbf16> to vector<8x128xbf16>
    %c16_111 = arith.constant 16 : index
    %c256_112 = arith.constant 256 : index
    %115 = vector.load %arg6[%c16_111, %c256_112] : memref<72x1024xbf16, #tpu.memory_space<vmem>>, vector<8x128xbf16>
    tpu.vector_store %arg6[%c16_111, %c256_112], %114 {strides = array<i32>} : memref<72x1024xbf16, #tpu.memory_space<vmem>>, vector<8x128xbf16>,
    %c3_i32_113 = arith.constant 3 : i32
    %116 = arith.addi %1, %c3_i32_113 : i32
    %c0_i32_114 = arith.constant 0 : i32
    %117 = arith.addi %116, %c0_i32_114 : i32
    %c0_115 = arith.constant 0 : index
    %118 = arith.index_cast %117 : i32 to index
    %c0_116 = arith.constant 0 : index
    %c2_117 = arith.constant 2 : index
    %119 = vector.load %arg2[%c0_115, %118, %c0_116, %c2_117] : memref<1x18x8x256xbf16, #tpu.memory_space<vmem>>, vector<1x1x8x128xbf16>
    %120 = vector.shape_cast %119 : vector<1x1x8x128xbf16> to vector<8x128xbf16>
    %c16_118 = arith.constant 16 : index
    %c384_119 = arith.constant 384 : index
    %121 = vector.load %arg6[%c16_118, %c384_119] : memref<72x1024xbf16, #tpu.memory_space<vmem>>, vector<8x128xbf16>
    tpu.vector_store %arg6[%c16_118, %c384_119], %120 {strides = array<i32>} : memref<72x1024xbf16, #tpu.memory_space<vmem>>, vector<8x128xbf16>,
    %c4_i32_120 = arith.constant 4 : i32
    %122 = arith.addi %1, %c4_i32_120 : i32
    %c0_i32_121 = arith.constant 0 : i32
    %123 = arith.addi %122, %c0_i32_121 : i32
    %c0_122 = arith.constant 0 : index
    %124 = arith.index_cast %123 : i32 to index
    %c0_123 = arith.constant 0 : index
    %c2_124 = arith.constant 2 : index
    %125 = vector.load %arg2[%c0_122, %124, %c0_123, %c2_124] : memref<1x18x8x256xbf16, #tpu.memory_space<vmem>>, vector<1x1x8x128xbf16>
    %126 = vector.shape_cast %125 : vector<1x1x8x128xbf16> to vector<8x128xbf16>
    %c16_125 = arith.constant 16 : index
    %c512_126 = arith.constant 512 : index
    %127 = vector.load %arg6[%c16_125, %c512_126] : memref<72x1024xbf16, #tpu.memory_space<vmem>>, vector<8x128xbf16>
    tpu.vector_store %arg6[%c16_125, %c512_126], %126 {strides = array<i32>} : memref<72x1024xbf16, #tpu.memory_space<vmem>>, vector<8x128xbf16>,
    %c5_i32_127 = arith.constant 5 : i32
    %128 = arith.addi %1, %c5_i32_127 : i32
    %c0_i32_128 = arith.constant 0 : i32
    %129 = arith.addi %128, %c0_i32_128 : i32
    %c0_129 = arith.constant 0 : index
    %130 = arith.index_cast %129 : i32 to index
    %c0_130 = arith.constant 0 : index
    %c2_131 = arith.constant 2 : index
    %131 = vector.load %arg2[%c0_129, %130, %c0_130, %c2_131] : memref<1x18x8x256xbf16, #tpu.memory_space<vmem>>, vector<1x1x8x128xbf16>
    %132 = vector.shape_cast %131 : vector<1x1x8x128xbf16> to vector<8x128xbf16>
    %c16_132 = arith.constant 16 : index
    %c640_133 = arith.constant 640 : index
    %133 = vector.load %arg6[%c16_132, %c640_133] : memref<72x1024xbf16, #tpu.memory_space<vmem>>, vector<8x128xbf16>
    tpu.vector_store %arg6[%c16_132, %c640_133], %132 {strides = array<i32>} : memref<72x1024xbf16, #tpu.memory_space<vmem>>, vector<8x128xbf16>,
    %c6_i32_134 = arith.constant 6 : i32
    %134 = arith.addi %1, %c6_i32_134 : i32
    %c0_i32_135 = arith.constant 0 : i32
    %135 = arith.addi %134, %c0_i32_135 : i32
    %c0_136 = arith.constant 0 : index
    %136 = arith.index_cast %135 : i32 to index
    %c0_137 = arith.constant 0 : index
    %c2_138 = arith.constant 2 : index
    %137 = vector.load %arg2[%c0_136, %136, %c0_137, %c2_138] : memref<1x18x8x256xbf16, #tpu.memory_space<vmem>>, vector<1x1x8x128xbf16>
    %138 = vector.shape_cast %137 : vector<1x1x8x128xbf16> to vector<8x128xbf16>
    %c16_139 = arith.constant 16 : index
    %c768_140 = arith.constant 768 : index
    %139 = vector.load %arg6[%c16_139, %c768_140] : memref<72x1024xbf16, #tpu.memory_space<vmem>>, vector<8x128xbf16>
    tpu.vector_store %arg6[%c16_139, %c768_140], %138 {strides = array<i32>} : memref<72x1024xbf16, #tpu.memory_space<vmem>>, vector<8x128xbf16>,
    %c7_i32_141 = arith.constant 7 : i32
    %140 = arith.addi %1, %c7_i32_141 : i32
    %c0_i32_142 = arith.constant 0 : i32
    %141 = arith.addi %140, %c0_i32_142 : i32
    %c0_143 = arith.constant 0 : index
    %142 = arith.index_cast %141 : i32 to index
    %c0_144 = arith.constant 0 : index
    %c2_145 = arith.constant 2 : index
    %143 = vector.load %arg2[%c0_143, %142, %c0_144, %c2_145] : memref<1x18x8x256xbf16, #tpu.memory_space<vmem>>, vector<1x1x8x128xbf16>
    %144 = vector.shape_cast %143 : vector<1x1x8x128xbf16> to vector<8x128xbf16>
    %c16_146 = arith.constant 16 : index
    %c896_147 = arith.constant 896 : index
    %145 = vector.load %arg6[%c16_146, %c896_147] : memref<72x1024xbf16, #tpu.memory_space<vmem>>, vector<8x128xbf16>
    tpu.vector_store %arg6[%c16_146, %c896_147], %144 {strides = array<i32>} : memref<72x1024xbf16, #tpu.memory_space<vmem>>, vector<8x128xbf16>,
    %c0_i32_148 = arith.constant 0 : i32
    %146 = arith.addi %1, %c0_i32_148 : i32
    %c1_i32_149 = arith.constant 1 : i32
    %147 = arith.addi %146, %c1_i32_149 : i32
    %c0_150 = arith.constant 0 : index
    %148 = arith.index_cast %147 : i32 to index
    %c0_151 = arith.constant 0 : index
    %c0_152 = arith.constant 0 : index
    %149 = vector.load %arg2[%c0_150, %148, %c0_151, %c0_152] : memref<1x18x8x256xbf16, #tpu.memory_space<vmem>>, vector<1x1x8x128xbf16>
    %150 = vector.shape_cast %149 : vector<1x1x8x128xbf16> to vector<8x128xbf16>
    %c24 = arith.constant 24 : index
    %c0_153 = arith.constant 0 : index
    %151 = vector.load %arg6[%c24, %c0_153] : memref<72x1024xbf16, #tpu.memory_space<vmem>>, vector<8x128xbf16>
    tpu.vector_store %arg6[%c24, %c0_153], %150 {strides = array<i32>} : memref<72x1024xbf16, #tpu.memory_space<vmem>>, vector<8x128xbf16>,
    %c1_i32_154 = arith.constant 1 : i32
    %152 = arith.addi %1, %c1_i32_154 : i32
    %c1_i32_155 = arith.constant 1 : i32
    %153 = arith.addi %152, %c1_i32_155 : i32
    %c0_156 = arith.constant 0 : index
    %154 = arith.index_cast %153 : i32 to index
    %c0_157 = arith.constant 0 : index
    %c0_158 = arith.constant 0 : index
    %155 = vector.load %arg2[%c0_156, %154, %c0_157, %c0_158] : memref<1x18x8x256xbf16, #tpu.memory_space<vmem>>, vector<1x1x8x128xbf16>
    %156 = vector.shape_cast %155 : vector<1x1x8x128xbf16> to vector<8x128xbf16>
    %c24_159 = arith.constant 24 : index
    %c128_160 = arith.constant 128 : index
    %157 = vector.load %arg6[%c24_159, %c128_160] : memref<72x1024xbf16, #tpu.memory_space<vmem>>, vector<8x128xbf16>
    tpu.vector_store %arg6[%c24_159, %c128_160], %156 {strides = array<i32>} : memref<72x1024xbf16, #tpu.memory_space<vmem>>, vector<8x128xbf16>,
    %c2_i32_161 = arith.constant 2 : i32
    %158 = arith.addi %1, %c2_i32_161 : i32
    %c1_i32_162 = arith.constant 1 : i32
    %159 = arith.addi %158, %c1_i32_162 : i32
    %c0_163 = arith.constant 0 : index
    %160 = arith.index_cast %159 : i32 to index
    %c0_164 = arith.constant 0 : index
    %c0_165 = arith.constant 0 : index
    %161 = vector.load %arg2[%c0_163, %160, %c0_164, %c0_165] : memref<1x18x8x256xbf16, #tpu.memory_space<vmem>>, vector<1x1x8x128xbf16>
    %162 = vector.shape_cast %161 : vector<1x1x8x128xbf16> to vector<8x128xbf16>
    %c24_166 = arith.constant 24 : index
    %c256_167 = arith.constant 256 : index
    %163 = vector.load %arg6[%c24_166, %c256_167] : memref<72x1024xbf16, #tpu.memory_space<vmem>>, vector<8x128xbf16>
    tpu.vector_store %arg6[%c24_166, %c256_167], %162 {strides = array<i32>} : memref<72x1024xbf16, #tpu.memory_space<vmem>>, vector<8x128xbf16>,
    %c3_i32_168 = arith.constant 3 : i32
    %164 = arith.addi %1, %c3_i32_168 : i32
    %c1_i32_169 = arith.constant 1 : i32
    %165 = arith.addi %164, %c1_i32_169 : i32
    %c0_170 = arith.constant 0 : index
    %166 = arith.index_cast %165 : i32 to index
    %c0_171 = arith.constant 0 : index
    %c0_172 = arith.constant 0 : index
    %167 = vector.load %arg2[%c0_170, %166, %c0_171, %c0_172] : memref<1x18x8x256xbf16, #tpu.memory_space<vmem>>, vector<1x1x8x128xbf16>
    %168 = vector.shape_cast %167 : vector<1x1x8x128xbf16> to vector<8x128xbf16>
    %c24_173 = arith.constant 24 : index
    %c384_174 = arith.constant 384 : index
    %169 = vector.load %arg6[%c24_173, %c384_174] : memref<72x1024xbf16, #tpu.memory_space<vmem>>, vector<8x128xbf16>
    tpu.vector_store %arg6[%c24_173, %c384_174], %168 {strides = array<i32>} : memref<72x1024xbf16, #tpu.memory_space<vmem>>, vector<8x128xbf16>,
    %c4_i32_175 = arith.constant 4 : i32
    %170 = arith.addi %1, %c4_i32_175 : i32
    %c1_i32_176 = arith.constant 1 : i32
    %171 = arith.addi %170, %c1_i32_176 : i32
    %c0_177 = arith.constant 0 : index
    %172 = arith.index_cast %171 : i32 to index
    %c0_178 = arith.constant 0 : index
    %c0_179 = arith.constant 0 : index
    %173 = vector.load %arg2[%c0_177, %172, %c0_178, %c0_179] : memref<1x18x8x256xbf16, #tpu.memory_space<vmem>>, vector<1x1x8x128xbf16>
    %174 = vector.shape_cast %173 : vector<1x1x8x128xbf16> to vector<8x128xbf16>
    %c24_180 = arith.constant 24 : index
    %c512_181 = arith.constant 512 : index
    %175 = vector.load %arg6[%c24_180, %c512_181] : memref<72x1024xbf16, #tpu.memory_space<vmem>>, vector<8x128xbf16>
    tpu.vector_store %arg6[%c24_180, %c512_181], %174 {strides = array<i32>} : memref<72x1024xbf16, #tpu.memory_space<vmem>>, vector<8x128xbf16>,
    %c5_i32_182 = arith.constant 5 : i32
    %176 = arith.addi %1, %c5_i32_182 : i32
    %c1_i32_183 = arith.constant 1 : i32
    %177 = arith.addi %176, %c1_i32_183 : i32
    %c0_184 = arith.constant 0 : index
    %178 = arith.index_cast %177 : i32 to index
    %c0_185 = arith.constant 0 : index
    %c0_186 = arith.constant 0 : index
    %179 = vector.load %arg2[%c0_184, %178, %c0_185, %c0_186] : memref<1x18x8x256xbf16, #tpu.memory_space<vmem>>, vector<1x1x8x128xbf16>
    %180 = vector.shape_cast %179 : vector<1x1x8x128xbf16> to vector<8x128xbf16>
    %c24_187 = arith.constant 24 : index
    %c640_188 = arith.constant 640 : index
    %181 = vector.load %arg6[%c24_187, %c640_188] : memref<72x1024xbf16, #tpu.memory_space<vmem>>, vector<8x128xbf16>
    tpu.vector_store %arg6[%c24_187, %c640_188], %180 {strides = array<i32>} : memref<72x1024xbf16, #tpu.memory_space<vmem>>, vector<8x128xbf16>,
    %c6_i32_189 = arith.constant 6 : i32
    %182 = arith.addi %1, %c6_i32_189 : i32
    %c1_i32_190 = arith.constant 1 : i32
    %183 = arith.addi %182, %c1_i32_190 : i32
    %c0_191 = arith.constant 0 : index
    %184 = arith.index_cast %183 : i32 to index
    %c0_192 = arith.constant 0 : index
    %c0_193 = arith.constant 0 : index
    %185 = vector.load %arg2[%c0_191, %184, %c0_192, %c0_193] : memref<1x18x8x256xbf16, #tpu.memory_space<vmem>>, vector<1x1x8x128xbf16>
    %186 = vector.shape_cast %185 : vector<1x1x8x128xbf16> to vector<8x128xbf16>
    %c24_194 = arith.constant 24 : index
    %c768_195 = arith.constant 768 : index
    %187 = vector.load %arg6[%c24_194, %c768_195] : memref<72x1024xbf16, #tpu.memory_space<vmem>>, vector<8x128xbf16>
    tpu.vector_store %arg6[%c24_194, %c768_195], %186 {strides = array<i32>} : memref<72x1024xbf16, #tpu.memory_space<vmem>>, vector<8x128xbf16>,
    %c7_i32_196 = arith.constant 7 : i32
    %188 = arith.addi %1, %c7_i32_196 : i32
    %c1_i32_197 = arith.constant 1 : i32
    %189 = arith.addi %188, %c1_i32_197 : i32
    %c0_198 = arith.constant 0 : index
    %190 = arith.index_cast %189 : i32 to index
    %c0_199 = arith.constant 0 : index
    %c0_200 = arith.constant 0 : index
    %191 = vector.load %arg2[%c0_198, %190, %c0_199, %c0_200] : memref<1x18x8x256xbf16, #tpu.memory_space<vmem>>, vector<1x1x8x128xbf16>
    %192 = vector.shape_cast %191 : vector<1x1x8x128xbf16> to vector<8x128xbf16>
    %c24_201 = arith.constant 24 : index
    %c896_202 = arith.constant 896 : index
    %193 = vector.load %arg6[%c24_201, %c896_202] : memref<72x1024xbf16, #tpu.memory_space<vmem>>, vector<8x128xbf16>
    tpu.vector_store %arg6[%c24_201, %c896_202], %192 {strides = array<i32>} : memref<72x1024xbf16, #tpu.memory_space<vmem>>, vector<8x128xbf16>,
    %c0_i32_203 = arith.constant 0 : i32
    %194 = arith.addi %1, %c0_i32_203 : i32
    %c1_i32_204 = arith.constant 1 : i32
    %195 = arith.addi %194, %c1_i32_204 : i32
    %c0_205 = arith.constant 0 : index
    %196 = arith.index_cast %195 : i32 to index
    %c0_206 = arith.constant 0 : index
    %c1_207 = arith.constant 1 : index
    %197 = vector.load %arg2[%c0_205, %196, %c0_206, %c1_207] : memref<1x18x8x256xbf16, #tpu.memory_space<vmem>>, vector<1x1x8x128xbf16>
    %198 = vector.shape_cast %197 : vector<1x1x8x128xbf16> to vector<8x128xbf16>
    %c32 = arith.constant 32 : index
    %c0_208 = arith.constant 0 : index
    %199 = vector.load %arg6[%c32, %c0_208] : memref<72x1024xbf16, #tpu.memory_space<vmem>>, vector<8x128xbf16>
    tpu.vector_store %arg6[%c32, %c0_208], %198 {strides = array<i32>} : memref<72x1024xbf16, #tpu.memory_space<vmem>>, vector<8x128xbf16>,
    %c1_i32_209 = arith.constant 1 : i32
    %200 = arith.addi %1, %c1_i32_209 : i32
    %c1_i32_210 = arith.constant 1 : i32
    %201 = arith.addi %200, %c1_i32_210 : i32
    %c0_211 = arith.constant 0 : index
    %202 = arith.index_cast %201 : i32 to index
    %c0_212 = arith.constant 0 : index
    %c1_213 = arith.constant 1 : index
    %203 = vector.load %arg2[%c0_211, %202, %c0_212, %c1_213] : memref<1x18x8x256xbf16, #tpu.memory_space<vmem>>, vector<1x1x8x128xbf16>
    %204 = vector.shape_cast %203 : vector<1x1x8x128xbf16> to vector<8x128xbf16>
    %c32_214 = arith.constant 32 : index
    %c128_215 = arith.constant 128 : index
    %205 = vector.load %arg6[%c32_214, %c128_215] : memref<72x1024xbf16, #tpu.memory_space<vmem>>, vector<8x128xbf16>
    tpu.vector_store %arg6[%c32_214, %c128_215], %204 {strides = array<i32>} : memref<72x1024xbf16, #tpu.memory_space<vmem>>, vector<8x128xbf16>,
    %c2_i32_216 = arith.constant 2 : i32
    %206 = arith.addi %1, %c2_i32_216 : i32
    %c1_i32_217 = arith.constant 1 : i32
    %207 = arith.addi %206, %c1_i32_217 : i32
    %c0_218 = arith.constant 0 : index
    %208 = arith.index_cast %207 : i32 to index
    %c0_219 = arith.constant 0 : index
    %c1_220 = arith.constant 1 : index
    %209 = vector.load %arg2[%c0_218, %208, %c0_219, %c1_220] : memref<1x18x8x256xbf16, #tpu.memory_space<vmem>>, vector<1x1x8x128xbf16>
    %210 = vector.shape_cast %209 : vector<1x1x8x128xbf16> to vector<8x128xbf16>
    %c32_221 = arith.constant 32 : index
    %c256_222 = arith.constant 256 : index
    %211 = vector.load %arg6[%c32_221, %c256_222] : memref<72x1024xbf16, #tpu.memory_space<vmem>>, vector<8x128xbf16>
    tpu.vector_store %arg6[%c32_221, %c256_222], %210 {strides = array<i32>} : memref<72x1024xbf16, #tpu.memory_space<vmem>>, vector<8x128xbf16>,
    %c3_i32_223 = arith.constant 3 : i32
    %212 = arith.addi %1, %c3_i32_223 : i32
    %c1_i32_224 = arith.constant 1 : i32
    %213 = arith.addi %212, %c1_i32_224 : i32
    %c0_225 = arith.constant 0 : index
    %214 = arith.index_cast %213 : i32 to index
    %c0_226 = arith.constant 0 : index
    %c1_227 = arith.constant 1 : index
    %215 = vector.load %arg2[%c0_225, %214, %c0_226, %c1_227] : memref<1x18x8x256xbf16, #tpu.memory_space<vmem>>, vector<1x1x8x128xbf16>
    %216 = vector.shape_cast %215 : vector<1x1x8x128xbf16> to vector<8x128xbf16>
    %c32_228 = arith.constant 32 : index
    %c384_229 = arith.constant 384 : index
    %217 = vector.load %arg6[%c32_228, %c384_229] : memref<72x1024xbf16, #tpu.memory_space<vmem>>, vector<8x128xbf16>
    tpu.vector_store %arg6[%c32_228, %c384_229], %216 {strides = array<i32>} : memref<72x1024xbf16, #tpu.memory_space<vmem>>, vector<8x128xbf16>,
    %c4_i32_230 = arith.constant 4 : i32
    %218 = arith.addi %1, %c4_i32_230 : i32
    %c1_i32_231 = arith.constant 1 : i32
    %219 = arith.addi %218, %c1_i32_231 : i32
    %c0_232 = arith.constant 0 : index
    %220 = arith.index_cast %219 : i32 to index
    %c0_233 = arith.constant 0 : index
    %c1_234 = arith.constant 1 : index
    %221 = vector.load %arg2[%c0_232, %220, %c0_233, %c1_234] : memref<1x18x8x256xbf16, #tpu.memory_space<vmem>>, vector<1x1x8x128xbf16>
    %222 = vector.shape_cast %221 : vector<1x1x8x128xbf16> to vector<8x128xbf16>
    %c32_235 = arith.constant 32 : index
    %c512_236 = arith.constant 512 : index
    %223 = vector.load %arg6[%c32_235, %c512_236] : memref<72x1024xbf16, #tpu.memory_space<vmem>>, vector<8x128xbf16>
    tpu.vector_store %arg6[%c32_235, %c512_236], %222 {strides = array<i32>} : memref<72x1024xbf16, #tpu.memory_space<vmem>>, vector<8x128xbf16>,
    %c5_i32_237 = arith.constant 5 : i32
    %224 = arith.addi %1, %c5_i32_237 : i32
    %c1_i32_238 = arith.constant 1 : i32
    %225 = arith.addi %224, %c1_i32_238 : i32
    %c0_239 = arith.constant 0 : index
    %226 = arith.index_cast %225 : i32 to index
    %c0_240 = arith.constant 0 : index
    %c1_241 = arith.constant 1 : index
    %227 = vector.load %arg2[%c0_239, %226, %c0_240, %c1_241] : memref<1x18x8x256xbf16, #tpu.memory_space<vmem>>, vector<1x1x8x128xbf16>
    %228 = vector.shape_cast %227 : vector<1x1x8x128xbf16> to vector<8x128xbf16>
    %c32_242 = arith.constant 32 : index
    %c640_243 = arith.constant 640 : index
    %229 = vector.load %arg6[%c32_242, %c640_243] : memref<72x1024xbf16, #tpu.memory_space<vmem>>, vector<8x128xbf16>
    tpu.vector_store %arg6[%c32_242, %c640_243], %228 {strides = array<i32>} : memref<72x1024xbf16, #tpu.memory_space<vmem>>, vector<8x128xbf16>,
    %c6_i32_244 = arith.constant 6 : i32
    %230 = arith.addi %1, %c6_i32_244 : i32
    %c1_i32_245 = arith.constant 1 : i32
    %231 = arith.addi %230, %c1_i32_245 : i32
    %c0_246 = arith.constant 0 : index
    %232 = arith.index_cast %231 : i32 to index
    %c0_247 = arith.constant 0 : index
    %c1_248 = arith.constant 1 : index
    %233 = vector.load %arg2[%c0_246, %232, %c0_247, %c1_248] : memref<1x18x8x256xbf16, #tpu.memory_space<vmem>>, vector<1x1x8x128xbf16>
    %234 = vector.shape_cast %233 : vector<1x1x8x128xbf16> to vector<8x128xbf16>
    %c32_249 = arith.constant 32 : index
    %c768_250 = arith.constant 768 : index
    %235 = vector.load %arg6[%c32_249, %c768_250] : memref<72x1024xbf16, #tpu.memory_space<vmem>>, vector<8x128xbf16>
    tpu.vector_store %arg6[%c32_249, %c768_250], %234 {strides = array<i32>} : memref<72x1024xbf16, #tpu.memory_space<vmem>>, vector<8x128xbf16>,
    %c7_i32_251 = arith.constant 7 : i32
    %236 = arith.addi %1, %c7_i32_251 : i32
    %c1_i32_252 = arith.constant 1 : i32
    %237 = arith.addi %236, %c1_i32_252 : i32
    %c0_253 = arith.constant 0 : index
    %238 = arith.index_cast %237 : i32 to index
    %c0_254 = arith.constant 0 : index
    %c1_255 = arith.constant 1 : index
    %239 = vector.load %arg2[%c0_253, %238, %c0_254, %c1_255] : memref<1x18x8x256xbf16, #tpu.memory_space<vmem>>, vector<1x1x8x128xbf16>
    %240 = vector.shape_cast %239 : vector<1x1x8x128xbf16> to vector<8x128xbf16>
    %c32_256 = arith.constant 32 : index
    %c896_257 = arith.constant 896 : index
    %241 = vector.load %arg6[%c32_256, %c896_257] : memref<72x1024xbf16, #tpu.memory_space<vmem>>, vector<8x128xbf16>
    tpu.vector_store %arg6[%c32_256, %c896_257], %240 {strides = array<i32>} : memref<72x1024xbf16, #tpu.memory_space<vmem>>, vector<8x128xbf16>,
    %c0_i32_258 = arith.constant 0 : i32
    %242 = arith.addi %1, %c0_i32_258 : i32
    %c1_i32_259 = arith.constant 1 : i32
    %243 = arith.addi %242, %c1_i32_259 : i32
    %c0_260 = arith.constant 0 : index
    %244 = arith.index_cast %243 : i32 to index
    %c0_261 = arith.constant 0 : index
    %c2_262 = arith.constant 2 : index
    %245 = vector.load %arg2[%c0_260, %244, %c0_261, %c2_262] : memref<1x18x8x256xbf16, #tpu.memory_space<vmem>>, vector<1x1x8x128xbf16>
    %246 = vector.shape_cast %245 : vector<1x1x8x128xbf16> to vector<8x128xbf16>
    %c40 = arith.constant 40 : index
    %c0_263 = arith.constant 0 : index
    %247 = vector.load %arg6[%c40, %c0_263] : memref<72x1024xbf16, #tpu.memory_space<vmem>>, vector<8x128xbf16>
    tpu.vector_store %arg6[%c40, %c0_263], %246 {strides = array<i32>} : memref<72x1024xbf16, #tpu.memory_space<vmem>>, vector<8x128xbf16>,
    %c1_i32_264 = arith.constant 1 : i32
    %248 = arith.addi %1, %c1_i32_264 : i32
    %c1_i32_265 = arith.constant 1 : i32
    %249 = arith.addi %248, %c1_i32_265 : i32
    %c0_266 = arith.constant 0 : index
    %250 = arith.index_cast %249 : i32 to index
    %c0_267 = arith.constant 0 : index
    %c2_268 = arith.constant 2 : index
    %251 = vector.load %arg2[%c0_266, %250, %c0_267, %c2_268] : memref<1x18x8x256xbf16, #tpu.memory_space<vmem>>, vector<1x1x8x128xbf16>
    %252 = vector.shape_cast %251 : vector<1x1x8x128xbf16> to vector<8x128xbf16>
    %c40_269 = arith.constant 40 : index
    %c128_270 = arith.constant 128 : index
    %253 = vector.load %arg6[%c40_269, %c128_270] : memref<72x1024xbf16, #tpu.memory_space<vmem>>, vector<8x128xbf16>
    tpu.vector_store %arg6[%c40_269, %c128_270], %252 {strides = array<i32>} : memref<72x1024xbf16, #tpu.memory_space<vmem>>, vector<8x128xbf16>,
    %c2_i32_271 = arith.constant 2 : i32
    %254 = arith.addi %1, %c2_i32_271 : i32
    %c1_i32_272 = arith.constant 1 : i32
    %255 = arith.addi %254, %c1_i32_272 : i32
    %c0_273 = arith.constant 0 : index
    %256 = arith.index_cast %255 : i32 to index
    %c0_274 = arith.constant 0 : index
    %c2_275 = arith.constant 2 : index
    %257 = vector.load %arg2[%c0_273, %256, %c0_274, %c2_275] : memref<1x18x8x256xbf16, #tpu.memory_space<vmem>>, vector<1x1x8x128xbf16>
    %258 = vector.shape_cast %257 : vector<1x1x8x128xbf16> to vector<8x128xbf16>
    %c40_276 = arith.constant 40 : index
    %c256_277 = arith.constant 256 : index
    %259 = vector.load %arg6[%c40_276, %c256_277] : memref<72x1024xbf16, #tpu.memory_space<vmem>>, vector<8x128xbf16>
    tpu.vector_store %arg6[%c40_276, %c256_277], %258 {strides = array<i32>} : memref<72x1024xbf16, #tpu.memory_space<vmem>>, vector<8x128xbf16>,
    %c3_i32_278 = arith.constant 3 : i32
    %260 = arith.addi %1, %c3_i32_278 : i32
    %c1_i32_279 = arith.constant 1 : i32
    %261 = arith.addi %260, %c1_i32_279 : i32
    %c0_280 = arith.constant 0 : index
    %262 = arith.index_cast %261 : i32 to index
    %c0_281 = arith.constant 0 : index
    %c2_282 = arith.constant 2 : index
    %263 = vector.load %arg2[%c0_280, %262, %c0_281, %c2_282] : memref<1x18x8x256xbf16, #tpu.memory_space<vmem>>, vector<1x1x8x128xbf16>
    %264 = vector.shape_cast %263 : vector<1x1x8x128xbf16> to vector<8x128xbf16>
    %c40_283 = arith.constant 40 : index
    %c384_284 = arith.constant 384 : index
    %265 = vector.load %arg6[%c40_283, %c384_284] : memref<72x1024xbf16, #tpu.memory_space<vmem>>, vector<8x128xbf16>
    tpu.vector_store %arg6[%c40_283, %c384_284], %264 {strides = array<i32>} : memref<72x1024xbf16, #tpu.memory_space<vmem>>, vector<8x128xbf16>,
    %c4_i32_285 = arith.constant 4 : i32
    %266 = arith.addi %1, %c4_i32_285 : i32
    %c1_i32_286 = arith.constant 1 : i32
    %267 = arith.addi %266, %c1_i32_286 : i32
    %c0_287 = arith.constant 0 : index
    %268 = arith.index_cast %267 : i32 to index
    %c0_288 = arith.constant 0 : index
    %c2_289 = arith.constant 2 : index
    %269 = vector.load %arg2[%c0_287, %268, %c0_288, %c2_289] : memref<1x18x8x256xbf16, #tpu.memory_space<vmem>>, vector<1x1x8x128xbf16>
    %270 = vector.shape_cast %269 : vector<1x1x8x128xbf16> to vector<8x128xbf16>
    %c40_290 = arith.constant 40 : index
    %c512_291 = arith.constant 512 : index
    %271 = vector.load %arg6[%c40_290, %c512_291] : memref<72x1024xbf16, #tpu.memory_space<vmem>>, vector<8x128xbf16>
    tpu.vector_store %arg6[%c40_290, %c512_291], %270 {strides = array<i32>} : memref<72x1024xbf16, #tpu.memory_space<vmem>>, vector<8x128xbf16>,
    %c5_i32_292 = arith.constant 5 : i32
    %272 = arith.addi %1, %c5_i32_292 : i32
    %c1_i32_293 = arith.constant 1 : i32
    %273 = arith.addi %272, %c1_i32_293 : i32
    %c0_294 = arith.constant 0 : index
    %274 = arith.index_cast %273 : i32 to index
    %c0_295 = arith.constant 0 : index
    %c2_296 = arith.constant 2 : index
    %275 = vector.load %arg2[%c0_294, %274, %c0_295, %c2_296] : memref<1x18x8x256xbf16, #tpu.memory_space<vmem>>, vector<1x1x8x128xbf16>
    %276 = vector.shape_cast %275 : vector<1x1x8x128xbf16> to vector<8x128xbf16>
    %c40_297 = arith.constant 40 : index
    %c640_298 = arith.constant 640 : index
    %277 = vector.load %arg6[%c40_297, %c640_298] : memref<72x1024xbf16, #tpu.memory_space<vmem>>, vector<8x128xbf16>
    tpu.vector_store %arg6[%c40_297, %c640_298], %276 {strides = array<i32>} : memref<72x1024xbf16, #tpu.memory_space<vmem>>, vector<8x128xbf16>,
    %c6_i32_299 = arith.constant 6 : i32
    %278 = arith.addi %1, %c6_i32_299 : i32
    %c1_i32_300 = arith.constant 1 : i32
    %279 = arith.addi %278, %c1_i32_300 : i32
    %c0_301 = arith.constant 0 : index
    %280 = arith.index_cast %279 : i32 to index
    %c0_302 = arith.constant 0 : index
    %c2_303 = arith.constant 2 : index
    %281 = vector.load %arg2[%c0_301, %280, %c0_302, %c2_303] : memref<1x18x8x256xbf16, #tpu.memory_space<vmem>>, vector<1x1x8x128xbf16>
    %282 = vector.shape_cast %281 : vector<1x1x8x128xbf16> to vector<8x128xbf16>
    %c40_304 = arith.constant 40 : index
    %c768_305 = arith.constant 768 : index
    %283 = vector.load %arg6[%c40_304, %c768_305] : memref<72x1024xbf16, #tpu.memory_space<vmem>>, vector<8x128xbf16>
    tpu.vector_store %arg6[%c40_304, %c768_305], %282 {strides = array<i32>} : memref<72x1024xbf16, #tpu.memory_space<vmem>>, vector<8x128xbf16>,
    %c7_i32_306 = arith.constant 7 : i32
    %284 = arith.addi %1, %c7_i32_306 : i32
    %c1_i32_307 = arith.constant 1 : i32
    %285 = arith.addi %284, %c1_i32_307 : i32
    %c0_308 = arith.constant 0 : index
    %286 = arith.index_cast %285 : i32 to index
    %c0_309 = arith.constant 0 : index
    %c2_310 = arith.constant 2 : index
    %287 = vector.load %arg2[%c0_308, %286, %c0_309, %c2_310] : memref<1x18x8x256xbf16, #tpu.memory_space<vmem>>, vector<1x1x8x128xbf16>
    %288 = vector.shape_cast %287 : vector<1x1x8x128xbf16> to vector<8x128xbf16>
    %c40_311 = arith.constant 40 : index
    %c896_312 = arith.constant 896 : index
    %289 = vector.load %arg6[%c40_311, %c896_312] : memref<72x1024xbf16, #tpu.memory_space<vmem>>, vector<8x128xbf16>
    tpu.vector_store %arg6[%c40_311, %c896_312], %288 {strides = array<i32>} : memref<72x1024xbf16, #tpu.memory_space<vmem>>, vector<8x128xbf16>,
    %c0_i32_313 = arith.constant 0 : i32
    %290 = arith.addi %1, %c0_i32_313 : i32
    %c2_i32_314 = arith.constant 2 : i32
    %291 = arith.addi %290, %c2_i32_314 : i32
    %c0_315 = arith.constant 0 : index
    %292 = arith.index_cast %291 : i32 to index
    %c0_316 = arith.constant 0 : index
    %c0_317 = arith.constant 0 : index
    %293 = vector.load %arg2[%c0_315, %292, %c0_316, %c0_317] : memref<1x18x8x256xbf16, #tpu.memory_space<vmem>>, vector<1x1x8x128xbf16>
    %294 = vector.shape_cast %293 : vector<1x1x8x128xbf16> to vector<8x128xbf16>
    %c48 = arith.constant 48 : index
    %c0_318 = arith.constant 0 : index
    %295 = vector.load %arg6[%c48, %c0_318] : memref<72x1024xbf16, #tpu.memory_space<vmem>>, vector<8x128xbf16>
    tpu.vector_store %arg6[%c48, %c0_318], %294 {strides = array<i32>} : memref<72x1024xbf16, #tpu.memory_space<vmem>>, vector<8x128xbf16>,
    %c1_i32_319 = arith.constant 1 : i32
    %296 = arith.addi %1, %c1_i32_319 : i32
    %c2_i32_320 = arith.constant 2 : i32
    %297 = arith.addi %296, %c2_i32_320 : i32
    %c0_321 = arith.constant 0 : index
    %298 = arith.index_cast %297 : i32 to index
    %c0_322 = arith.constant 0 : index
    %c0_323 = arith.constant 0 : index
    %299 = vector.load %arg2[%c0_321, %298, %c0_322, %c0_323] : memref<1x18x8x256xbf16, #tpu.memory_space<vmem>>, vector<1x1x8x128xbf16>
    %300 = vector.shape_cast %299 : vector<1x1x8x128xbf16> to vector<8x128xbf16>
    %c48_324 = arith.constant 48 : index
    %c128_325 = arith.constant 128 : index
    %301 = vector.load %arg6[%c48_324, %c128_325] : memref<72x1024xbf16, #tpu.memory_space<vmem>>, vector<8x128xbf16>
    tpu.vector_store %arg6[%c48_324, %c128_325], %300 {strides = array<i32>} : memref<72x1024xbf16, #tpu.memory_space<vmem>>, vector<8x128xbf16>,
    %c2_i32_326 = arith.constant 2 : i32
    %302 = arith.addi %1, %c2_i32_326 : i32
    %c2_i32_327 = arith.constant 2 : i32
    %303 = arith.addi %302, %c2_i32_327 : i32
    %c0_328 = arith.constant 0 : index
    %304 = arith.index_cast %303 : i32 to index
    %c0_329 = arith.constant 0 : index
    %c0_330 = arith.constant 0 : index
    %305 = vector.load %arg2[%c0_328, %304, %c0_329, %c0_330] : memref<1x18x8x256xbf16, #tpu.memory_space<vmem>>, vector<1x1x8x128xbf16>
    %306 = vector.shape_cast %305 : vector<1x1x8x128xbf16> to vector<8x128xbf16>
    %c48_331 = arith.constant 48 : index
    %c256_332 = arith.constant 256 : index
    %307 = vector.load %arg6[%c48_331, %c256_332] : memref<72x1024xbf16, #tpu.memory_space<vmem>>, vector<8x128xbf16>
    tpu.vector_store %arg6[%c48_331, %c256_332], %306 {strides = array<i32>} : memref<72x1024xbf16, #tpu.memory_space<vmem>>, vector<8x128xbf16>,
    %c3_i32_333 = arith.constant 3 : i32
    %308 = arith.addi %1, %c3_i32_333 : i32
    %c2_i32_334 = arith.constant 2 : i32
    %309 = arith.addi %308, %c2_i32_334 : i32
    %c0_335 = arith.constant 0 : index
    %310 = arith.index_cast %309 : i32 to index
    %c0_336 = arith.constant 0 : index
    %c0_337 = arith.constant 0 : index
    %311 = vector.load %arg2[%c0_335, %310, %c0_336, %c0_337] : memref<1x18x8x256xbf16, #tpu.memory_space<vmem>>, vector<1x1x8x128xbf16>
    %312 = vector.shape_cast %311 : vector<1x1x8x128xbf16> to vector<8x128xbf16>
    %c48_338 = arith.constant 48 : index
    %c384_339 = arith.constant 384 : index
    %313 = vector.load %arg6[%c48_338, %c384_339] : memref<72x1024xbf16, #tpu.memory_space<vmem>>, vector<8x128xbf16>
    tpu.vector_store %arg6[%c48_338, %c384_339], %312 {strides = array<i32>} : memref<72x1024xbf16, #tpu.memory_space<vmem>>, vector<8x128xbf16>,
    %c4_i32_340 = arith.constant 4 : i32
    %314 = arith.addi %1, %c4_i32_340 : i32
    %c2_i32_341 = arith.constant 2 : i32
    %315 = arith.addi %314, %c2_i32_341 : i32
    %c0_342 = arith.constant 0 : index
    %316 = arith.index_cast %315 : i32 to index
    %c0_343 = arith.constant 0 : index
    %c0_344 = arith.constant 0 : index
    %317 = vector.load %arg2[%c0_342, %316, %c0_343, %c0_344] : memref<1x18x8x256xbf16, #tpu.memory_space<vmem>>, vector<1x1x8x128xbf16>
    %318 = vector.shape_cast %317 : vector<1x1x8x128xbf16> to vector<8x128xbf16>
    %c48_345 = arith.constant 48 : index
    %c512_346 = arith.constant 512 : index
    %319 = vector.load %arg6[%c48_345, %c512_346] : memref<72x1024xbf16, #tpu.memory_space<vmem>>, vector<8x128xbf16>
    tpu.vector_store %arg6[%c48_345, %c512_346], %318 {strides = array<i32>} : memref<72x1024xbf16, #tpu.memory_space<vmem>>, vector<8x128xbf16>,
    %c5_i32_347 = arith.constant 5 : i32
    %320 = arith.addi %1, %c5_i32_347 : i32
    %c2_i32_348 = arith.constant 2 : i32
    %321 = arith.addi %320, %c2_i32_348 : i32
    %c0_349 = arith.constant 0 : index
    %322 = arith.index_cast %321 : i32 to index
    %c0_350 = arith.constant 0 : index
    %c0_351 = arith.constant 0 : index
    %323 = vector.load %arg2[%c0_349, %322, %c0_350, %c0_351] : memref<1x18x8x256xbf16, #tpu.memory_space<vmem>>, vector<1x1x8x128xbf16>
    %324 = vector.shape_cast %323 : vector<1x1x8x128xbf16> to vector<8x128xbf16>
    %c48_352 = arith.constant 48 : index
    %c640_353 = arith.constant 640 : index
    %325 = vector.load %arg6[%c48_352, %c640_353] : memref<72x1024xbf16, #tpu.memory_space<vmem>>, vector<8x128xbf16>
    tpu.vector_store %arg6[%c48_352, %c640_353], %324 {strides = array<i32>} : memref<72x1024xbf16, #tpu.memory_space<vmem>>, vector<8x128xbf16>,
    %c6_i32_354 = arith.constant 6 : i32
    %326 = arith.addi %1, %c6_i32_354 : i32
    %c2_i32_355 = arith.constant 2 : i32
    %327 = arith.addi %326, %c2_i32_355 : i32
    %c0_356 = arith.constant 0 : index
    %328 = arith.index_cast %327 : i32 to index
    %c0_357 = arith.constant 0 : index
    %c0_358 = arith.constant 0 : index
    %329 = vector.load %arg2[%c0_356, %328, %c0_357, %c0_358] : memref<1x18x8x256xbf16, #tpu.memory_space<vmem>>, vector<1x1x8x128xbf16>
    %330 = vector.shape_cast %329 : vector<1x1x8x128xbf16> to vector<8x128xbf16>
    %c48_359 = arith.constant 48 : index
    %c768_360 = arith.constant 768 : index
    %331 = vector.load %arg6[%c48_359, %c768_360] : memref<72x1024xbf16, #tpu.memory_space<vmem>>, vector<8x128xbf16>
    tpu.vector_store %arg6[%c48_359, %c768_360], %330 {strides = array<i32>} : memref<72x1024xbf16, #tpu.memory_space<vmem>>, vector<8x128xbf16>,
    %c7_i32_361 = arith.constant 7 : i32
    %332 = arith.addi %1, %c7_i32_361 : i32
    %c2_i32_362 = arith.constant 2 : i32
    %333 = arith.addi %332, %c2_i32_362 : i32
    %c0_363 = arith.constant 0 : index
    %334 = arith.index_cast %333 : i32 to index
    %c0_364 = arith.constant 0 : index
    %c0_365 = arith.constant 0 : index
    %335 = vector.load %arg2[%c0_363, %334, %c0_364, %c0_365] : memref<1x18x8x256xbf16, #tpu.memory_space<vmem>>, vector<1x1x8x128xbf16>
    %336 = vector.shape_cast %335 : vector<1x1x8x128xbf16> to vector<8x128xbf16>
    %c48_366 = arith.constant 48 : index
    %c896_367 = arith.constant 896 : index
    %337 = vector.load %arg6[%c48_366, %c896_367] : memref<72x1024xbf16, #tpu.memory_space<vmem>>, vector<8x128xbf16>
    tpu.vector_store %arg6[%c48_366, %c896_367], %336 {strides = array<i32>} : memref<72x1024xbf16, #tpu.memory_space<vmem>>, vector<8x128xbf16>,
    %c0_i32_368 = arith.constant 0 : i32
    %338 = arith.addi %1, %c0_i32_368 : i32
    %c2_i32_369 = arith.constant 2 : i32
    %339 = arith.addi %338, %c2_i32_369 : i32
    %c0_370 = arith.constant 0 : index
    %340 = arith.index_cast %339 : i32 to index
    %c0_371 = arith.constant 0 : index
    %c1_372 = arith.constant 1 : index
    %341 = vector.load %arg2[%c0_370, %340, %c0_371, %c1_372] : memref<1x18x8x256xbf16, #tpu.memory_space<vmem>>, vector<1x1x8x128xbf16>
    %342 = vector.shape_cast %341 : vector<1x1x8x128xbf16> to vector<8x128xbf16>
    %c56 = arith.constant 56 : index
    %c0_373 = arith.constant 0 : index
    %343 = vector.load %arg6[%c56, %c0_373] : memref<72x1024xbf16, #tpu.memory_space<vmem>>, vector<8x128xbf16>
    tpu.vector_store %arg6[%c56, %c0_373], %342 {strides = array<i32>} : memref<72x1024xbf16, #tpu.memory_space<vmem>>, vector<8x128xbf16>,
    %c1_i32_374 = arith.constant 1 : i32
    %344 = arith.addi %1, %c1_i32_374 : i32
    %c2_i32_375 = arith.constant 2 : i32
    %345 = arith.addi %344, %c2_i32_375 : i32
    %c0_376 = arith.constant 0 : index
    %346 = arith.index_cast %345 : i32 to index
    %c0_377 = arith.constant 0 : index
    %c1_378 = arith.constant 1 : index
    %347 = vector.load %arg2[%c0_376, %346, %c0_377, %c1_378] : memref<1x18x8x256xbf16, #tpu.memory_space<vmem>>, vector<1x1x8x128xbf16>
    %348 = vector.shape_cast %347 : vector<1x1x8x128xbf16> to vector<8x128xbf16>
    %c56_379 = arith.constant 56 : index
    %c128_380 = arith.constant 128 : index
    %349 = vector.load %arg6[%c56_379, %c128_380] : memref<72x1024xbf16, #tpu.memory_space<vmem>>, vector<8x128xbf16>
    tpu.vector_store %arg6[%c56_379, %c128_380], %348 {strides = array<i32>} : memref<72x1024xbf16, #tpu.memory_space<vmem>>, vector<8x128xbf16>,
    %c2_i32_381 = arith.constant 2 : i32
    %350 = arith.addi %1, %c2_i32_381 : i32
    %c2_i32_382 = arith.constant 2 : i32
    %351 = arith.addi %350, %c2_i32_382 : i32
    %c0_383 = arith.constant 0 : index
    %352 = arith.index_cast %351 : i32 to index
    %c0_384 = arith.constant 0 : index
    %c1_385 = arith.constant 1 : index
    %353 = vector.load %arg2[%c0_383, %352, %c0_384, %c1_385] : memref<1x18x8x256xbf16, #tpu.memory_space<vmem>>, vector<1x1x8x128xbf16>
    %354 = vector.shape_cast %353 : vector<1x1x8x128xbf16> to vector<8x128xbf16>
    %c56_386 = arith.constant 56 : index
    %c256_387 = arith.constant 256 : index
    %355 = vector.load %arg6[%c56_386, %c256_387] : memref<72x1024xbf16, #tpu.memory_space<vmem>>, vector<8x128xbf16>
    tpu.vector_store %arg6[%c56_386, %c256_387], %354 {strides = array<i32>} : memref<72x1024xbf16, #tpu.memory_space<vmem>>, vector<8x128xbf16>,
    %c3_i32_388 = arith.constant 3 : i32
    %356 = arith.addi %1, %c3_i32_388 : i32
    %c2_i32_389 = arith.constant 2 : i32
    %357 = arith.addi %356, %c2_i32_389 : i32
    %c0_390 = arith.constant 0 : index
    %358 = arith.index_cast %357 : i32 to index
    %c0_391 = arith.constant 0 : index
    %c1_392 = arith.constant 1 : index
    %359 = vector.load %arg2[%c0_390, %358, %c0_391, %c1_392] : memref<1x18x8x256xbf16, #tpu.memory_space<vmem>>, vector<1x1x8x128xbf16>
    %360 = vector.shape_cast %359 : vector<1x1x8x128xbf16> to vector<8x128xbf16>
    %c56_393 = arith.constant 56 : index
    %c384_394 = arith.constant 384 : index
    %361 = vector.load %arg6[%c56_393, %c384_394] : memref<72x1024xbf16, #tpu.memory_space<vmem>>, vector<8x128xbf16>
    tpu.vector_store %arg6[%c56_393, %c384_394], %360 {strides = array<i32>} : memref<72x1024xbf16, #tpu.memory_space<vmem>>, vector<8x128xbf16>,
    %c4_i32_395 = arith.constant 4 : i32
    %362 = arith.addi %1, %c4_i32_395 : i32
    %c2_i32_396 = arith.constant 2 : i32
    %363 = arith.addi %362, %c2_i32_396 : i32
    %c0_397 = arith.constant 0 : index
    %364 = arith.index_cast %363 : i32 to index
    %c0_398 = arith.constant 0 : index
    %c1_399 = arith.constant 1 : index
    %365 = vector.load %arg2[%c0_397, %364, %c0_398, %c1_399] : memref<1x18x8x256xbf16, #tpu.memory_space<vmem>>, vector<1x1x8x128xbf16>
    %366 = vector.shape_cast %365 : vector<1x1x8x128xbf16> to vector<8x128xbf16>
    %c56_400 = arith.constant 56 : index
    %c512_401 = arith.constant 512 : index
    %367 = vector.load %arg6[%c56_400, %c512_401] : memref<72x1024xbf16, #tpu.memory_space<vmem>>, vector<8x128xbf16>
    tpu.vector_store %arg6[%c56_400, %c512_401], %366 {strides = array<i32>} : memref<72x1024xbf16, #tpu.memory_space<vmem>>, vector<8x128xbf16>,
    %c5_i32_402 = arith.constant 5 : i32
    %368 = arith.addi %1, %c5_i32_402 : i32
    %c2_i32_403 = arith.constant 2 : i32
    %369 = arith.addi %368, %c2_i32_403 : i32
    %c0_404 = arith.constant 0 : index
    %370 = arith.index_cast %369 : i32 to index
    %c0_405 = arith.constant 0 : index
    %c1_406 = arith.constant 1 : index
    %371 = vector.load %arg2[%c0_404, %370, %c0_405, %c1_406] : memref<1x18x8x256xbf16, #tpu.memory_space<vmem>>, vector<1x1x8x128xbf16>
    %372 = vector.shape_cast %371 : vector<1x1x8x128xbf16> to vector<8x128xbf16>
    %c56_407 = arith.constant 56 : index
    %c640_408 = arith.constant 640 : index
    %373 = vector.load %arg6[%c56_407, %c640_408] : memref<72x1024xbf16, #tpu.memory_space<vmem>>, vector<8x128xbf16>
    tpu.vector_store %arg6[%c56_407, %c640_408], %372 {strides = array<i32>} : memref<72x1024xbf16, #tpu.memory_space<vmem>>, vector<8x128xbf16>,
    %c6_i32_409 = arith.constant 6 : i32
    %374 = arith.addi %1, %c6_i32_409 : i32
    %c2_i32_410 = arith.constant 2 : i32
    %375 = arith.addi %374, %c2_i32_410 : i32
    %c0_411 = arith.constant 0 : index
    %376 = arith.index_cast %375 : i32 to index
    %c0_412 = arith.constant 0 : index
    %c1_413 = arith.constant 1 : index
    %377 = vector.load %arg2[%c0_411, %376, %c0_412, %c1_413] : memref<1x18x8x256xbf16, #tpu.memory_space<vmem>>, vector<1x1x8x128xbf16>
    %378 = vector.shape_cast %377 : vector<1x1x8x128xbf16> to vector<8x128xbf16>
    %c56_414 = arith.constant 56 : index
    %c768_415 = arith.constant 768 : index
    %379 = vector.load %arg6[%c56_414, %c768_415] : memref<72x1024xbf16, #tpu.memory_space<vmem>>, vector<8x128xbf16>
    tpu.vector_store %arg6[%c56_414, %c768_415], %378 {strides = array<i32>} : memref<72x1024xbf16, #tpu.memory_space<vmem>>, vector<8x128xbf16>,
    %c7_i32_416 = arith.constant 7 : i32
    %380 = arith.addi %1, %c7_i32_416 : i32
    %c2_i32_417 = arith.constant 2 : i32
    %381 = arith.addi %380, %c2_i32_417 : i32
    %c0_418 = arith.constant 0 : index
    %382 = arith.index_cast %381 : i32 to index
    %c0_419 = arith.constant 0 : index
    %c1_420 = arith.constant 1 : index
    %383 = vector.load %arg2[%c0_418, %382, %c0_419, %c1_420] : memref<1x18x8x256xbf16, #tpu.memory_space<vmem>>, vector<1x1x8x128xbf16>
    %384 = vector.shape_cast %383 : vector<1x1x8x128xbf16> to vector<8x128xbf16>
    %c56_421 = arith.constant 56 : index
    %c896_422 = arith.constant 896 : index
    %385 = vector.load %arg6[%c56_421, %c896_422] : memref<72x1024xbf16, #tpu.memory_space<vmem>>, vector<8x128xbf16>
    tpu.vector_store %arg6[%c56_421, %c896_422], %384 {strides = array<i32>} : memref<72x1024xbf16, #tpu.memory_space<vmem>>, vector<8x128xbf16>,
    %c0_i32_423 = arith.constant 0 : i32
    %386 = arith.addi %1, %c0_i32_423 : i32
    %c2_i32_424 = arith.constant 2 : i32
    %387 = arith.addi %386, %c2_i32_424 : i32
    %c0_425 = arith.constant 0 : index
    %388 = arith.index_cast %387 : i32 to index
    %c0_426 = arith.constant 0 : index
    %c2_427 = arith.constant 2 : index
    %389 = vector.load %arg2[%c0_425, %388, %c0_426, %c2_427] : memref<1x18x8x256xbf16, #tpu.memory_space<vmem>>, vector<1x1x8x128xbf16>
    %390 = vector.shape_cast %389 : vector<1x1x8x128xbf16> to vector<8x128xbf16>
    %c64 = arith.constant 64 : index
    %c0_428 = arith.constant 0 : index
    %391 = vector.load %arg6[%c64, %c0_428] : memref<72x1024xbf16, #tpu.memory_space<vmem>>, vector<8x128xbf16>
    tpu.vector_store %arg6[%c64, %c0_428], %390 {strides = array<i32>} : memref<72x1024xbf16, #tpu.memory_space<vmem>>, vector<8x128xbf16>,
    %c1_i32_429 = arith.constant 1 : i32
    %392 = arith.addi %1, %c1_i32_429 : i32
    %c2_i32_430 = arith.constant 2 : i32
    %393 = arith.addi %392, %c2_i32_430 : i32
    %c0_431 = arith.constant 0 : index
    %394 = arith.index_cast %393 : i32 to index
    %c0_432 = arith.constant 0 : index
    %c2_433 = arith.constant 2 : index
    %395 = vector.load %arg2[%c0_431, %394, %c0_432, %c2_433] : memref<1x18x8x256xbf16, #tpu.memory_space<vmem>>, vector<1x1x8x128xbf16>
    %396 = vector.shape_cast %395 : vector<1x1x8x128xbf16> to vector<8x128xbf16>
    %c64_434 = arith.constant 64 : index
    %c128_435 = arith.constant 128 : index
    %397 = vector.load %arg6[%c64_434, %c128_435] : memref<72x1024xbf16, #tpu.memory_space<vmem>>, vector<8x128xbf16>
    tpu.vector_store %arg6[%c64_434, %c128_435], %396 {strides = array<i32>} : memref<72x1024xbf16, #tpu.memory_space<vmem>>, vector<8x128xbf16>,
    %c2_i32_436 = arith.constant 2 : i32
    %398 = arith.addi %1, %c2_i32_436 : i32
    %c2_i32_437 = arith.constant 2 : i32
    %399 = arith.addi %398, %c2_i32_437 : i32
    %c0_438 = arith.constant 0 : index
    %400 = arith.index_cast %399 : i32 to index
    %c0_439 = arith.constant 0 : index
    %c2_440 = arith.constant 2 : index
    %401 = vector.load %arg2[%c0_438, %400, %c0_439, %c2_440] : memref<1x18x8x256xbf16, #tpu.memory_space<vmem>>, vector<1x1x8x128xbf16>
    %402 = vector.shape_cast %401 : vector<1x1x8x128xbf16> to vector<8x128xbf16>
    %c64_441 = arith.constant 64 : index
    %c256_442 = arith.constant 256 : index
    %403 = vector.load %arg6[%c64_441, %c256_442] : memref<72x1024xbf16, #tpu.memory_space<vmem>>, vector<8x128xbf16>
    tpu.vector_store %arg6[%c64_441, %c256_442], %402 {strides = array<i32>} : memref<72x1024xbf16, #tpu.memory_space<vmem>>, vector<8x128xbf16>,
    %c3_i32_443 = arith.constant 3 : i32
    %404 = arith.addi %1, %c3_i32_443 : i32
    %c2_i32_444 = arith.constant 2 : i32
    %405 = arith.addi %404, %c2_i32_444 : i32
    %c0_445 = arith.constant 0 : index
    %406 = arith.index_cast %405 : i32 to index
    %c0_446 = arith.constant 0 : index
    %c2_447 = arith.constant 2 : index
    %407 = vector.load %arg2[%c0_445, %406, %c0_446, %c2_447] : memref<1x18x8x256xbf16, #tpu.memory_space<vmem>>, vector<1x1x8x128xbf16>
    %408 = vector.shape_cast %407 : vector<1x1x8x128xbf16> to vector<8x128xbf16>
    %c64_448 = arith.constant 64 : index
    %c384_449 = arith.constant 384 : index
    %409 = vector.load %arg6[%c64_448, %c384_449] : memref<72x1024xbf16, #tpu.memory_space<vmem>>, vector<8x128xbf16>
    tpu.vector_store %arg6[%c64_448, %c384_449], %408 {strides = array<i32>} : memref<72x1024xbf16, #tpu.memory_space<vmem>>, vector<8x128xbf16>,
    %c4_i32_450 = arith.constant 4 : i32
    %410 = arith.addi %1, %c4_i32_450 : i32
    %c2_i32_451 = arith.constant 2 : i32
    %411 = arith.addi %410, %c2_i32_451 : i32
    %c0_452 = arith.constant 0 : index
    %412 = arith.index_cast %411 : i32 to index
    %c0_453 = arith.constant 0 : index
    %c2_454 = arith.constant 2 : index
    %413 = vector.load %arg2[%c0_452, %412, %c0_453, %c2_454] : memref<1x18x8x256xbf16, #tpu.memory_space<vmem>>, vector<1x1x8x128xbf16>
    %414 = vector.shape_cast %413 : vector<1x1x8x128xbf16> to vector<8x128xbf16>
    %c64_455 = arith.constant 64 : index
    %c512_456 = arith.constant 512 : index
    %415 = vector.load %arg6[%c64_455, %c512_456] : memref<72x1024xbf16, #tpu.memory_space<vmem>>, vector<8x128xbf16>
    tpu.vector_store %arg6[%c64_455, %c512_456], %414 {strides = array<i32>} : memref<72x1024xbf16, #tpu.memory_space<vmem>>, vector<8x128xbf16>,
    %c5_i32_457 = arith.constant 5 : i32
    %416 = arith.addi %1, %c5_i32_457 : i32
    %c2_i32_458 = arith.constant 2 : i32
    %417 = arith.addi %416, %c2_i32_458 : i32
    %c0_459 = arith.constant 0 : index
    %418 = arith.index_cast %417 : i32 to index
    %c0_460 = arith.constant 0 : index
    %c2_461 = arith.constant 2 : index
    %419 = vector.load %arg2[%c0_459, %418, %c0_460, %c2_461] : memref<1x18x8x256xbf16, #tpu.memory_space<vmem>>, vector<1x1x8x128xbf16>
    %420 = vector.shape_cast %419 : vector<1x1x8x128xbf16> to vector<8x128xbf16>
    %c64_462 = arith.constant 64 : index
    %c640_463 = arith.constant 640 : index
    %421 = vector.load %arg6[%c64_462, %c640_463] : memref<72x1024xbf16, #tpu.memory_space<vmem>>, vector<8x128xbf16>
    tpu.vector_store %arg6[%c64_462, %c640_463], %420 {strides = array<i32>} : memref<72x1024xbf16, #tpu.memory_space<vmem>>, vector<8x128xbf16>,
    %c6_i32_464 = arith.constant 6 : i32
    %422 = arith.addi %1, %c6_i32_464 : i32
    %c2_i32_465 = arith.constant 2 : i32
    %423 = arith.addi %422, %c2_i32_465 : i32
    %c0_466 = arith.constant 0 : index
    %424 = arith.index_cast %423 : i32 to index
    %c0_467 = arith.constant 0 : index
    %c2_468 = arith.constant 2 : index
    %425 = vector.load %arg2[%c0_466, %424, %c0_467, %c2_468] : memref<1x18x8x256xbf16, #tpu.memory_space<vmem>>, vector<1x1x8x128xbf16>
    %426 = vector.shape_cast %425 : vector<1x1x8x128xbf16> to vector<8x128xbf16>
    %c64_469 = arith.constant 64 : index
    %c768_470 = arith.constant 768 : index
    %427 = vector.load %arg6[%c64_469, %c768_470] : memref<72x1024xbf16, #tpu.memory_space<vmem>>, vector<8x128xbf16>
    tpu.vector_store %arg6[%c64_469, %c768_470], %426 {strides = array<i32>} : memref<72x1024xbf16, #tpu.memory_space<vmem>>, vector<8x128xbf16>,
    %c7_i32_471 = arith.constant 7 : i32
    %428 = arith.addi %1, %c7_i32_471 : i32
    %c2_i32_472 = arith.constant 2 : i32
    %429 = arith.addi %428, %c2_i32_472 : i32
    %c0_473 = arith.constant 0 : index
    %430 = arith.index_cast %429 : i32 to index
    %c0_474 = arith.constant 0 : index
    %c2_475 = arith.constant 2 : index
    %431 = vector.load %arg2[%c0_473, %430, %c0_474, %c2_475] : memref<1x18x8x256xbf16, #tpu.memory_space<vmem>>, vector<1x1x8x128xbf16>
    %432 = vector.shape_cast %431 : vector<1x1x8x128xbf16> to vector<8x128xbf16>
    %c64_476 = arith.constant 64 : index
    %c896_477 = arith.constant 896 : index
    %433 = vector.load %arg6[%c64_476, %c896_477] : memref<72x1024xbf16, #tpu.memory_space<vmem>>, vector<8x128xbf16>
    tpu.vector_store %arg6[%c64_476, %c896_477], %432 {strides = array<i32>} : memref<72x1024xbf16, #tpu.memory_space<vmem>>, vector<8x128xbf16>,
    %c0_478 = arith.constant 0 : index
    %c0_479 = arith.constant 0 : index
    %434 = vector.load %arg3[%c0_478, %c0_479] : memref<8x72xbf16, #tpu.memory_space<vmem>>, vector<8x72xbf16>
    %c0_480 = arith.constant 0 : index
    %c0_481 = arith.constant 0 : index
    %435 = vector.load %arg6[%c0_480, %c0_481] : memref<72x1024xbf16, #tpu.memory_space<vmem>>, vector<72x1024xbf16>
    %cst = arith.constant dense<0.000000e+00> : vector<8x1024xf32>
    %436 = tpu.matmul %434, %435, %cst {dimension_numbers = #tpu.dot_dimension_numbers<[1], [0], [0], [1], [0, 0, 1, 1], [], []>} : vector<8x72xbf16>, vector<72x1024xbf16>, vector<8x1024xf32> -> vector<8x1024xf32>
    %c0_482 = arith.constant 0 : index
    %c0_483 = arith.constant 0 : index
    %437 = vector.load %arg4[%c0_482, %c0_483] : memref<8x1xf32, #tpu.memory_space<vmem>>, vector<8x1xf32>
    %438 = vector.broadcast %437 : vector<8x1xf32> to vector<8x1024xf32>
    %439 = arith.addf %436, %438 : vector<8x1024xf32>
    %c0_484 = arith.constant 0 : index
    %c0_485 = arith.constant 0 : index
    %c0_486 = arith.constant 0 : index
    %440 = vector.load %arg5[%c0_484, %c0_485, %c0_486] : memref<1x8x1024xf32, #tpu.memory_space<vmem>>, vector<1x8x1024xf32>
    %441 = vector.shape_cast %440 : vector<1x8x1024xf32> to vector<8x1024xf32>
    %442 = vector.shape_cast %439 : vector<8x1024xf32> to vector<1x8x1024xf32>
    tpu.vector_store %arg5[%c0_484, %c0_485, %c0_486], %442 {strides = array<i32>} : memref<1x8x1024xf32, #tpu.memory_space<vmem>>, vector<1x8x1024xf32>,
    return
  }
  func.func @transform_0(%arg0: i32, %arg1: i32) -> (i32, i32, i32, i32) {
    %c0_i32 = arith.constant 0 : i32
    %c0_i32_0 = arith.constant 0 : i32
    %c0_i32_1 = arith.constant 0 : i32
    %c0_i32_2 = arith.constant 0 : i32
    return %arg0, %c0_i32, %c0_i32_0, %c0_i32_1 : i32, i32, i32, i32
  }
  func.func @transform_1(%arg0: i32, %arg1: i32) -> (i32, i32) {
    %c0_i32 = arith.constant 0 : i32
    %c0_i32_0 = arith.constant 0 : i32
    %c0_i32_1 = arith.constant 0 : i32
    return %c0_i32, %c0_i32_0 : i32, i32
  }
  func.func @transform_2(%arg0: i32, %arg1: i32) -> (i32, i32) {
    %c0_i32 = arith.constant 0 : i32
    %c0_i32_0 = arith.constant 0 : i32
    %c0_i32_1 = arith.constant 0 : i32
    return %c0_i32, %c0_i32_0 : i32, i32
  }
  func.func @transform_3(%arg0: i32, %arg1: i32) -> (i32, i32, i32) {
    %c0_i32 = arith.constant 0 : i32
    %c0_i32_0 = arith.constant 0 : i32
    return %arg0, %c0_i32, %arg1 : i32, i32, i32
  }
}

</mosaic_0001>

<llo_original>
// kernel: conv_layer_forward.1
$region0: #{conv_layer_forward.1}
  #allocation0 [shape = 'u32[]', space=smem, size = 0x4, offset = 0x4, fixed_abs, tag = 'smem constant byte address 0x4 - core index']
  #allocation1 [shape = 'u32[144,128]{1,0:T(1,128)}', space=vmem, size = 0x12000, scoped, tag = 'internal scratch']
  #allocation2 [shape = 'bf16[72,1024]{1,0:T(8,128)(2,1)}', space=vmem, size = 0x24000, scoped, tag = 'scratch operand']
  %s0 = inlined_call_operand.vmem [shape: bf16[2,18,8,256], index: 0, kind: input, shape index: {}]
  %s1 = inlined_call_operand.vmem [shape: bf16[8,72], index: 1, kind: input, shape index: {}]
  %s2 = inlined_call_operand.vmem [shape: f32[8,1], index: 2, kind: input, shape index: {}]
  %s3 = inlined_call_operand.vmem [shape: f32[2,8,2048], index: 3, kind: output, shape index: {}]
  %s4 = sld [smem:[#allocation0]]
  $region45: #{conv_layer_forward.1} parent=0
    _
  %s6 = ssub.s32 1, %s4
  %s7 = scalar_select 0, %s6, %s4
  loop: start=0, step=1, limit=6
  $region2: #{conv_layer_forward.1} parent=0 // loop_pre_header
    _
  $region3: #{conv_layer_forward.1} parent=0 // loop_header
    %s9 = sphi 0, %s13
    %p10 = scmp.ge.s32.totalorder %s9, 6
    %s16 = sphi 0, %s28
    %s17 = sphi 0, %s24
    %s18 = sphi 0, %s16
    %s19 = sphi 0, %s17
    %s20 = sphi 0, %s18
    %s21 = sphi 0, %s19
    %s31 = sphi 0, %s33
    %s34 = sphi 0, %s31
    %s35 = sphi 0, %s34
    %s51 = sphi 0, %s35
    %s55 = sphi 0, %s55
    %s57 = sphi 0, %s55
    %s58 = sphi 0, %s57
    %s72 = sphi 0, %s58
    %s76 = sphi 0, %s76
    %s78 = sphi 0, %s76
    %s79 = sphi 0, %s78
    %s93 = sphi 0, %s79
    %s101 = sphi 0, %s103
    %s104 = sphi 0, %s101
    %s105 = sphi 0, %s104
    %s121 = sphi 0, %s105
  $region4: #{conv_layer_forward.1} parent=0 // loop_header_branch
    %12 = sbr.rel (%p10) target = $region8
  $region5: #{conv_layer_forward.1} parent=0 // loop_body
    %s14 = ssub.s32 %s9, 1
    %s15 = ssub.s32 %s9, 2
    %s22 = sadd.s32 1, %s17
    %p23 = scmp.ge.s32.totalorder %s22, 2
    %s24 = scalar_select %p23, 0, %s22
    %s25 = sadd.s32 1, %s16
    %s26 = scalar_select %p23, %s25, %s16
    %p27 = scmp.ge.s32.totalorder %s26, 2
    %s28 = scalar_select %p27, 0, %s26
    %s29 = ssub.s32 %s16, %s28
    %p30 = scmp.eq.s32.totalorder %s29, 0
    %s32 = sadd.s32 %s31, 1
    %s33 = scalar_select %p30, %s31, %s32
    %p36 = pneg %p30
    %p37 = scmp.eq.s32.totalorder %s9, 3
    %p38 = por %p36, %p37
    %p39 = scmp.ne.s32.totalorder %s31, %s34
    %p40 = scmp.eq.s32.totalorder %s9, 0
    %p41 = por %p39, %p40
    %p42 = scmp.ne.s32.totalorder %s31, %s34
    %p43 = scmp.eq.s32.totalorder %s14, 3
    %p44 = por %p42, %p43
    %p45 = scmp.ne.s32.totalorder %s34, %s35
    %p46 = scmp.eq.s32.totalorder %s14, 0
    %p47 = por %p45, %p46
    %p48 = scmp.ne.s32.totalorder %s34, %s35
    %p49 = scmp.eq.s32.totalorder %s15, 3
    %p50 = por %p48, %p49
    %p52 = scmp.ne.s32.totalorder %s35, %s51
    %p53 = scmp.eq.s32.totalorder %s15, 0
    %p54 = por %p52, %p53
    %s56 = sadd.s32 %s55, 1
    %p59 = scmp.eq.s32.totalorder %s9, 3
    %p60 = scmp.ne.s32.totalorder %s55, %s57
    %p61 = scmp.eq.s32.totalorder %s9, 0
    %p62 = por %p60, %p61
    %p63 = scmp.ne.s32.totalorder %s55, %s57
    %p64 = scmp.eq.s32.totalorder %s14, 3
    %p65 = por %p63, %p64
    %p66 = scmp.ne.s32.totalorder %s57, %s58
    %p67 = scmp.eq.s32.totalorder %s14, 0
    %p68 = por %p66, %p67
    %p69 = scmp.ne.s32.totalorder %s57, %s58
    %p70 = scmp.eq.s32.totalorder %s15, 3
    %p71 = por %p69, %p70
    %p73 = scmp.ne.s32.totalorder %s58, %s72
    %p74 = scmp.eq.s32.totalorder %s15, 0
    %p75 = por %p73, %p74
    %s77 = sadd.s32 %s76, 1
    %p80 = scmp.eq.s32.totalorder %s9, 3
    %p81 = scmp.ne.s32.totalorder %s76, %s78
    %p82 = scmp.eq.s32.totalorder %s9, 0
    %p83 = por %p81, %p82
    %p84 = scmp.ne.s32.totalorder %s76, %s78
    %p85 = scmp.eq.s32.totalorder %s14, 3
    %p86 = por %p84, %p85
    %p87 = scmp.ne.s32.totalorder %s78, %s79
    %p88 = scmp.eq.s32.totalorder %s14, 0
    %p89 = por %p87, %p88
    %p90 = scmp.ne.s32.totalorder %s78, %s79
    %p91 = scmp.eq.s32.totalorder %s15, 3
    %p92 = por %p90, %p91
    %p94 = scmp.ne.s32.totalorder %s79, %s93
    %p95 = scmp.eq.s32.totalorder %s15, 0
    %p96 = por %p94, %p95
    %s97 = ssub.s32 %s16, %s28
    %s98 = ssub.s32 %s17, %s24
    %s99 = sor.u32 %s97, %s98
    %p100 = scmp.eq.s32.totalorder %s99, 0
    %s102 = sadd.s32 %s101, 1
    %s103 = scalar_select %p100, %s101, %s102
    %p106 = pneg %p100
    %p107 = scmp.eq.s32.totalorder %s9, 3
    %p108 = por %p106, %p107
    %p109 = scmp.ne.s32.totalorder %s101, %s104
    %p110 = scmp.eq.s32.totalorder %s9, 0
    %p111 = por %p109, %p110
    %p112 = scmp.ne.s32.totalorder %s101, %s104
    %p113 = scmp.eq.s32.totalorder %s14, 3
    %p114 = por %p112, %p113
    %p115 = scmp.ne.s32.totalorder %s104, %s105
    %p116 = scmp.eq.s32.totalorder %s14, 0
    %p117 = por %p115, %p116
    %p118 = scmp.ne.s32.totalorder %s104, %s105
    %p119 = scmp.eq.s32.totalorder %s15, 3
    %p120 = por %p118, %p119
    %p122 = scmp.ne.s32.totalorder %s105, %s121
    %p123 = scmp.eq.s32.totalorder %s15, 0
    %p124 = por %p122, %p123
    %p125 = scmp.le.s32.totalorder 1, %s9
    %p126 = scmp.lt.s32.totalorder %s9, 5
    %p127 = pnand %p125, %p126
    %p128 = pneg %p127
    // Predicated region
    $region9: #{conv_layer_forward.1} parent=5 // pred_check
      _
    $region10: #{conv_layer_forward.1} parent=5 // pred_check_branch
      %130 = sbr.rel (%p127) target = $region12
    $region11: #{conv_layer_forward.1} parent=5 // pred_region
      %s131 = ssub.s32 %s9, 1
      // Predicated region
      $region13: #{conv_layer_forward.1} parent=11 // pred_check
        %p132 = pneg %p68
      $region14: #{conv_layer_forward.1} parent=11 // pred_check_branch
        %134 = sbr.rel (%p132) target = $region16
      $region15: #{conv_layer_forward.1} parent=11 // pred_region
        _
      $region16: #{conv_layer_forward.1} parent=11 // pred_fallthru
        _
      // Predicated region
      $region17: #{conv_layer_forward.1} parent=11 // pred_check
        %p135 = pneg %p89
      $region18: #{conv_layer_forward.1} parent=11 // pred_check_branch
        %137 = sbr.rel (%p135) target = $region20
      $region19: #{conv_layer_forward.1} parent=11 // pred_region
        _
      $region20: #{conv_layer_forward.1} parent=11 // pred_fallthru
        _
    $region12: #{conv_layer_forward.1} parent=5 // pred_fallthru
      _
    %p138 = scmp.lt.s32.totalorder %s9, 4
    // Predicated region
    $region21: #{conv_layer_forward.1} parent=5 // pred_check
      %p139 = pneg %p138
    $region22: #{conv_layer_forward.1} parent=5 // pred_check_branch
      %141 = sbr.rel (%p139) target = $region24
    $region23: #{conv_layer_forward.1} parent=5 // pred_region
      // Predicated region
      $region25: #{conv_layer_forward.1} parent=23 // pred_check
        %p142 = pneg %p41
      $region26: #{conv_layer_forward.1} parent=23 // pred_check_branch
        %144 = sbr.rel (%p142) target = $region28
      $region27: #{conv_layer_forward.1} parent=23 // pred_region
        %p145 = scmp.lt.s32.totalorder %s16, 1
        %s146 = scalar_select %p145, %s16, 1
        %s147 = smul.addr %s146, 36
        %s148 = smul.addr %s147, 4
        %s149 = scalar_lea.vmem %s0, %s148
      $region28: #{conv_layer_forward.1} parent=23 // pred_fallthru
        _
    $region24: #{conv_layer_forward.1} parent=5 // pred_fallthru
      _
    %p150 = scmp.le.s32.totalorder 1, %s9
    %p151 = scmp.lt.s32.totalorder %s9, 5
    %p152 = pnand %p150, %p151
    %p153 = pneg %p152
    // Predicated region
    $region29: #{conv_layer_forward.1} parent=5 // pred_check
      _
    $region30: #{conv_layer_forward.1} parent=5 // pred_check_branch
      %155 = sbr.rel (%p152) target = $region32
    $region31: #{conv_layer_forward.1} parent=5 // pred_region
      %s156 = ssub.s32 %s9, 1
      %p157 = scmp.lt.s32.totalorder %s18, 1
      %s158 = scalar_select %p157, %s18, 1
      %s159 = smul.addr %s158, 36
      %s160 = smul.addr %s159, 4
      %s161 = scalar_lea.vmem %s0, %s160
      %p162 = pneg %p47
      %p163 = pneg %p44
      %p164 = pneg %p68
      %p165 = pneg %p65
      %p166 = pneg %p89
      %p167 = pneg %p86
      %p168 = pneg %p117
      %p169 = pneg %p114
      %s170 = smul.u32 8, %s19
      %p171 = scmp.lt.s32.totalorder %s18, 1
      %s172 = scalar_select %p171, %s18, 1
      %p173 = scmp.lt.s32.totalorder %s170, 15
      %s174 = scalar_select %p173, %s170, 15
      %s175 = smul.addr %s172, 16
      %s176 = sadd.s32 %s174, %s175
      %s177 = smul.addr %s176, 8
      %s178 = scalar_lea.vmem %s3, %s177
      %p179 = scmp.lt.s32.totalorder %s18, 1
      %s180 = scalar_select %p179, %s18, 1
      %s181 = smul.addr %s180, 36
      %s182 = smul.addr %s181, 4
      %s183 = scalar_lea.vmem %s0, %s182
      %s184 = smul.u32 8, %s19
      %p185 = scmp.lt.s32.totalorder %s18, 1
      %s186 = scalar_select %p185, %s18, 1
      %p187 = scmp.lt.s32.totalorder %s184, 15
      %s188 = scalar_select %p187, %s184, 15
      %s189 = smul.addr %s186, 16
      %s190 = sadd.s32 %s188, %s189
      %s191 = smul.addr %s190, 8
      %s192 = scalar_lea.vmem %s3, %s191
      %s193 = smul.u32 8, %s19
      %s195 = smul.u32 %s19, 8
      %s196 = smul.u32 %s195, 2
      %s197 = smul.addr %s196, 4
      %s198 = scalar_lea.vmem %s183, %s197
      %v199 = vld [vmem:[%s198] sm:$0xf]
      %200 = vst [vmem:[#allocation2] sm:$0xf] %v199
      %s201 = sadd.s32 %s195, 1
      %s202 = smul.u32 %s201, 2
      %s203 = smul.addr %s202, 4
      %s204 = scalar_lea.vmem %s183, %s203
      %v205 = vld [vmem:[%s204] sm:$0xf]
      %206 = vst [vmem:[#allocation2 + $0x4] sm:$0xf] %v205
      %s207 = sadd.s32 %s195, 2
      %s208 = smul.u32 %s207, 2
      %s209 = smul.addr %s208, 4
      %s210 = scalar_lea.vmem %s183, %s209
      %v211 = vld [vmem:[%s210] sm:$0xf]
      %212 = vst [vmem:[#allocation2 + $0x8] sm:$0xf] %v211
      %s213 = sadd.s32 %s195, 3
      %s214 = smul.u32 %s213, 2
      %s215 = smul.addr %s214, 4
      %s216 = scalar_lea.vmem %s183, %s215
      %v217 = vld [vmem:[%s216] sm:$0xf]
      %218 = vst [vmem:[#allocation2 + $0xc] sm:$0xf] %v217
      %s219 = sadd.s32 %s195, 4
      %s220 = smul.u32 %s219, 2
      %s221 = smul.addr %s220, 4
      %s222 = scalar_lea.vmem %s183, %s221
      %v223 = vld [vmem:[%s222] sm:$0xf]
      %224 = vst [vmem:[#allocation2 + $0x10] sm:$0xf] %v223
      %s225 = sadd.s32 %s195, 5
      %s226 = smul.u32 %s225, 2
      %s227 = smul.addr %s226, 4
      %s228 = scalar_lea.vmem %s183, %s227
      %v229 = vld [vmem:[%s228] sm:$0xf]
      %230 = vst [vmem:[#allocation2 + $0x14] sm:$0xf] %v229
      %s231 = sadd.s32 %s195, 6
      %s232 = smul.u32 %s231, 2
      %s233 = smul.addr %s232, 4
      %s234 = scalar_lea.vmem %s183, %s233
      %v235 = vld [vmem:[%s234] sm:$0xf]
      %236 = vst [vmem:[#allocation2 + $0x18] sm:$0xf] %v235
      %s237 = sadd.s32 %s195, 7
      %s238 = smul.u32 %s237, 2
      %s239 = smul.addr %s238, 4
      %s240 = scalar_lea.vmem %s183, %s239
      %v241 = vld [vmem:[%s240] sm:$0xf]
      %242 = vst [vmem:[#allocation2 + $0x1c] sm:$0xf] %v241
      %v243 = vld [vmem:[%s198] sm:$0xff]
      %245 = vrot.lane.b32.xlu0 %v243, 127
      %v246 = vpop.permute.xlu0 %245
      %v247 = vrot.slane %v246, 4
      %vm248 = vcmask 1039360
      %v249 = vsel %vm248, %v246, %v247
      %251 = vst [vmem:[#allocation2 + $0x20] sm:$0xf] %v249
      %v252 = vld [vmem:[%s204] sm:$0xff]
      %254 = vrot.lane.b32.xlu0 %v252, 127
      %v255 = vpop.permute.xlu0 %254
      %v256 = vrot.slane %v255, 4
      %v257 = vsel %vm248, %v255, %v256
      %259 = vst [vmem:[#allocation2 + $0x24] sm:$0xf] %v257
      %v260 = vld [vmem:[%s210] sm:$0xff]
      %262 = vrot.lane.b32.xlu0 %v260, 127
      %v263 = vpop.permute.xlu0 %262
      %v264 = vrot.slane %v263, 4
      %v265 = vsel %vm248, %v263, %v264
      %267 = vst [vmem:[#allocation2 + $0x28] sm:$0xf] %v265
      %v268 = vld [vmem:[%s216] sm:$0xff]
      %270 = vrot.lane.b32.xlu0 %v268, 127
      %v271 = vpop.permute.xlu0 %270
      %v272 = vrot.slane %v271, 4
      %v273 = vsel %vm248, %v271, %v272
      %275 = vst [vmem:[#allocation2 + $0x2c] sm:$0xf] %v273
      %v276 = vld [vmem:[%s222] sm:$0xff]
      %278 = vrot.lane.b32.xlu0 %v276, 127
      %v279 = vpop.permute.xlu0 %278
      %v280 = vrot.slane %v279, 4
      %v281 = vsel %vm248, %v279, %v280
      %283 = vst [vmem:[#allocation2 + $0x30] sm:$0xf] %v281
      %v284 = vld [vmem:[%s228] sm:$0xff]
      %286 = vrot.lane.b32.xlu0 %v284, 127
      %v287 = vpop.permute.xlu0 %286
      %v288 = vrot.slane %v287, 4
      %v289 = vsel %vm248, %v287, %v288
      %291 = vst [vmem:[#allocation2 + $0x34] sm:$0xf] %v289
      %v292 = vld [vmem:[%s234] sm:$0xff]
      %294 = vrot.lane.b32.xlu0 %v292, 127
      %v295 = vpop.permute.xlu0 %294
      %v296 = vrot.slane %v295, 4
      %v297 = vsel %vm248, %v295, %v296
      %299 = vst [vmem:[#allocation2 + $0x38] sm:$0xf] %v297
      %v300 = vld [vmem:[%s240] sm:$0xff]
      %302 = vrot.lane.b32.xlu0 %v300, 127
      %v303 = vpop.permute.xlu0 %302
      %v304 = vrot.slane %v303, 4
      %v305 = vsel %vm248, %v303, %v304
      %307 = vst [vmem:[#allocation2 + $0x3c] sm:$0xf] %v305
      %v308 = vld [vmem:[%s198] sm:$0xff]
      %310 = vrot.lane.b32.xlu0 %v308, 126
      %v311 = vpop.permute.xlu0 %310
      %v312 = vrot.slane %v311, 4
      %vm313 = vcmask 1031168
      %v314 = vsel %vm313, %v311, %v312
      %316 = vst [vmem:[#allocation2 + $0x40] sm:$0xf] %v314
      %v317 = vld [vmem:[%s204] sm:$0xff]
      %319 = vrot.lane.b32.xlu0 %v317, 126
      %v320 = vpop.permute.xlu0 %319
      %v321 = vrot.slane %v320, 4
      %v322 = vsel %vm313, %v320, %v321
      %324 = vst [vmem:[#allocation2 + $0x44] sm:$0xf] %v322
      %v325 = vld [vmem:[%s210] sm:$0xff]
      %327 = vrot.lane.b32.xlu0 %v325, 126
      %v328 = vpop.permute.xlu0 %327
      %v329 = vrot.slane %v328, 4
      %v330 = vsel %vm313, %v328, %v329
      %332 = vst [vmem:[#allocation2 + $0x48] sm:$0xf] %v330
      %v333 = vld [vmem:[%s216] sm:$0xff]
      %335 = vrot.lane.b32.xlu0 %v333, 126
      %v336 = vpop.permute.xlu0 %335
      %v337 = vrot.slane %v336, 4
      %v338 = vsel %vm313, %v336, %v337
      %340 = vst [vmem:[#allocation2 + $0x4c] sm:$0xf] %v338
      %v341 = vld [vmem:[%s222] sm:$0xff]
      %343 = vrot.lane.b32.xlu0 %v341, 126
      %v344 = vpop.permute.xlu0 %343
      %v345 = vrot.slane %v344, 4
      %v346 = vsel %vm313, %v344, %v345
      %348 = vst [vmem:[#allocation2 + $0x50] sm:$0xf] %v346
      %v349 = vld [vmem:[%s228] sm:$0xff]
      %351 = vrot.lane.b32.xlu0 %v349, 126
      %v352 = vpop.permute.xlu0 %351
      %v353 = vrot.slane %v352, 4
      %v354 = vsel %vm313, %v352, %v353
      %356 = vst [vmem:[#allocation2 + $0x54] sm:$0xf] %v354
      %v357 = vld [vmem:[%s234] sm:$0xff]
      %359 = vrot.lane.b32.xlu0 %v357, 126
      %v360 = vpop.permute.xlu0 %359
      %v361 = vrot.slane %v360, 4
      %v362 = vsel %vm313, %v360, %v361
      %364 = vst [vmem:[#allocation2 + $0x58] sm:$0xf] %v362
      %v365 = vld [vmem:[%s240] sm:$0xff]
      %367 = vrot.lane.b32.xlu0 %v365, 126
      %v368 = vpop.permute.xlu0 %367
      %v369 = vrot.slane %v368, 4
      %v370 = vsel %vm313, %v368, %v369
      %372 = vst [vmem:[#allocation2 + $0x5c] sm:$0xf] %v370
      %v373 = vld [vmem:[%s204] sm:$0xf]
      %374 = vst [vmem:[#allocation2 + $0x60] sm:$0xf] %v373
      %v375 = vld [vmem:[%s210] sm:$0xf]
      %376 = vst [vmem:[#allocation2 + $0x64] sm:$0xf] %v375
      %v377 = vld [vmem:[%s216] sm:$0xf]
      %378 = vst [vmem:[#allocation2 + $0x68] sm:$0xf] %v377
      %v379 = vld [vmem:[%s222] sm:$0xf]
      %380 = vst [vmem:[#allocation2 + $0x6c] sm:$0xf] %v379
      %v381 = vld [vmem:[%s228] sm:$0xf]
      %382 = vst [vmem:[#allocation2 + $0x70] sm:$0xf] %v381
      %v383 = vld [vmem:[%s234] sm:$0xf]
      %384 = vst [vmem:[#allocation2 + $0x74] sm:$0xf] %v383
      %v385 = vld [vmem:[%s240] sm:$0xf]
      %386 = vst [vmem:[#allocation2 + $0x78] sm:$0xf] %v385
      %s387 = sadd.s32 %s195, 8
      %s388 = smul.u32 %s387, 2
      %s389 = smul.addr %s388, 4
      %s390 = scalar_lea.vmem %s183, %s389
      %v391 = vld [vmem:[%s390] sm:$0xf]
      %392 = vst [vmem:[#allocation2 + $0x7c] sm:$0xf] %v391
      %v393 = vld [vmem:[%s204] sm:$0xff]
      %395 = vrot.lane.b32.xlu0 %v393, 127
      %v396 = vpop.permute.xlu0 %395
      %v397 = vrot.slane %v396, 4
      %v398 = vsel %vm248, %v396, %v397
      %400 = vst [vmem:[#allocation2 + $0x80] sm:$0xf] %v398
      %v401 = vld [vmem:[%s210] sm:$0xff]
      %403 = vrot.lane.b32.xlu0 %v401, 127
      %v404 = vpop.permute.xlu0 %403
      %v405 = vrot.slane %v404, 4
      %v406 = vsel %vm248, %v404, %v405
      %408 = vst [vmem:[#allocation2 + $0x84] sm:$0xf] %v406
      %v409 = vld [vmem:[%s216] sm:$0xff]
      %411 = vrot.lane.b32.xlu0 %v409, 127
      %v412 = vpop.permute.xlu0 %411
      %v413 = vrot.slane %v412, 4
      %v414 = vsel %vm248, %v412, %v413
      %416 = vst [vmem:[#allocation2 + $0x88] sm:$0xf] %v414
      %v417 = vld [vmem:[%s222] sm:$0xff]
      %419 = vrot.lane.b32.xlu0 %v417, 127
      %v420 = vpop.permute.xlu0 %419
      %v421 = vrot.slane %v420, 4
      %v422 = vsel %vm248, %v420, %v421
      %424 = vst [vmem:[#allocation2 + $0x8c] sm:$0xf] %v422
      %v425 = vld [vmem:[%s228] sm:$0xff]
      %427 = vrot.lane.b32.xlu0 %v425, 127
      %v428 = vpop.permute.xlu0 %427
      %v429 = vrot.slane %v428, 4
      %v430 = vsel %vm248, %v428, %v429
      %432 = vst [vmem:[#allocation2 + $0x90] sm:$0xf] %v430
      %v433 = vld [vmem:[%s234] sm:$0xff]
      %435 = vrot.lane.b32.xlu0 %v433, 127
      %v436 = vpop.permute.xlu0 %435
      %v437 = vrot.slane %v436, 4
      %v438 = vsel %vm248, %v436, %v437
      %440 = vst [vmem:[#allocation2 + $0x94] sm:$0xf] %v438
      %v441 = vld [vmem:[%s240] sm:$0xff]
      %443 = vrot.lane.b32.xlu0 %v441, 127
      %v444 = vpop.permute.xlu0 %443
      %v445 = vrot.slane %v444, 4
      %v446 = vsel %vm248, %v444, %v445
      %448 = vst [vmem:[#allocation2 + $0x98] sm:$0xf] %v446
      %v449 = vld [vmem:[%s390] sm:$0xff]
      %451 = vrot.lane.b32.xlu0 %v449, 127
      %v452 = vpop.permute.xlu0 %451
      %v453 = vrot.slane %v452, 4
      %v454 = vsel %vm248, %v452, %v453
      %456 = vst [vmem:[#allocation2 + $0x9c] sm:$0xf] %v454
      %v457 = vld [vmem:[%s204] sm:$0xff]
      %459 = vrot.lane.b32.xlu0 %v457, 126
      %v460 = vpop.permute.xlu0 %459
      %v461 = vrot.slane %v460, 4
      %v462 = vsel %vm313, %v460, %v461
      %464 = vst [vmem:[#allocation2 + $0xa0] sm:$0xf] %v462
      %v465 = vld [vmem:[%s210] sm:$0xff]
      %467 = vrot.lane.b32.xlu0 %v465, 126
      %v468 = vpop.permute.xlu0 %467
      %v469 = vrot.slane %v468, 4
      %v470 = vsel %vm313, %v468, %v469
      %472 = vst [vmem:[#allocation2 + $0xa4] sm:$0xf] %v470
      %v473 = vld [vmem:[%s216] sm:$0xff]
      %475 = vrot.lane.b32.xlu0 %v473, 126
      %v476 = vpop.permute.xlu0 %475
      %v477 = vrot.slane %v476, 4
      %v478 = vsel %vm313, %v476, %v477
      %480 = vst [vmem:[#allocation2 + $0xa8] sm:$0xf] %v478
      %v481 = vld [vmem:[%s222] sm:$0xff]
      %483 = vrot.lane.b32.xlu0 %v481, 126
      %v484 = vpop.permute.xlu0 %483
      %v485 = vrot.slane %v484, 4
      %v486 = vsel %vm313, %v484, %v485
      %488 = vst [vmem:[#allocation2 + $0xac] sm:$0xf] %v486
      %v489 = vld [vmem:[%s228] sm:$0xff]
      %491 = vrot.lane.b32.xlu0 %v489, 126
      %v492 = vpop.permute.xlu0 %491
      %v493 = vrot.slane %v492, 4
      %v494 = vsel %vm313, %v492, %v493
      %496 = vst [vmem:[#allocation2 + $0xb0] sm:$0xf] %v494
      %v497 = vld [vmem:[%s234] sm:$0xff]
      %499 = vrot.lane.b32.xlu0 %v497, 126
      %v500 = vpop.permute.xlu0 %499
      %v501 = vrot.slane %v500, 4
      %v502 = vsel %vm313, %v500, %v501
      %504 = vst [vmem:[#allocation2 + $0xb4] sm:$0xf] %v502
      %v505 = vld [vmem:[%s240] sm:$0xff]
      %507 = vrot.lane.b32.xlu0 %v505, 126
      %v508 = vpop.permute.xlu0 %507
      %v509 = vrot.slane %v508, 4
      %v510 = vsel %vm313, %v508, %v509
      %512 = vst [vmem:[#allocation2 + $0xb8] sm:$0xf] %v510
      %v513 = vld [vmem:[%s390] sm:$0xff]
      %515 = vrot.lane.b32.xlu0 %v513, 126
      %v516 = vpop.permute.xlu0 %515
      %v517 = vrot.slane %v516, 4
      %v518 = vsel %vm313, %v516, %v517
      %520 = vst [vmem:[#allocation2 + $0xbc] sm:$0xf] %v518
      %v521 = vld [vmem:[%s210] sm:$0xf]
      %522 = vst [vmem:[#allocation2 + $0xc0] sm:$0xf] %v521
      %v523 = vld [vmem:[%s216] sm:$0xf]
      %524 = vst [vmem:[#allocation2 + $0xc4] sm:$0xf] %v523
      %v525 = vld [vmem:[%s222] sm:$0xf]
      %526 = vst [vmem:[#allocation2 + $0xc8] sm:$0xf] %v525
      %v527 = vld [vmem:[%s228] sm:$0xf]
      %528 = vst [vmem:[#allocation2 + $0xcc] sm:$0xf] %v527
      %v529 = vld [vmem:[%s234] sm:$0xf]
      %530 = vst [vmem:[#allocation2 + $0xd0] sm:$0xf] %v529
      %v531 = vld [vmem:[%s240] sm:$0xf]
      %532 = vst [vmem:[#allocation2 + $0xd4] sm:$0xf] %v531
      %v533 = vld [vmem:[%s390] sm:$0xf]
      %534 = vst [vmem:[#allocation2 + $0xd8] sm:$0xf] %v533
      %s535 = sadd.s32 %s195, 9
      %s536 = smul.u32 %s535, 2
      %s537 = smul.addr %s536, 4
      %s538 = scalar_lea.vmem %s183, %s537
      %v539 = vld [vmem:[%s538] sm:$0xf]
      %540 = vst [vmem:[#allocation2 + $0xdc] sm:$0xf] %v539
      %v541 = vld [vmem:[%s210] sm:$0xff]
      %543 = vrot.lane.b32.xlu0 %v541, 127
      %v544 = vpop.permute.xlu0 %543
      %v545 = vrot.slane %v544, 4
      %v546 = vsel %vm248, %v544, %v545
      %548 = vst [vmem:[#allocation2 + $0xe0] sm:$0xf] %v546
      %v549 = vld [vmem:[%s216] sm:$0xff]
      %551 = vrot.lane.b32.xlu0 %v549, 127
      %v552 = vpop.permute.xlu0 %551
      %v553 = vrot.slane %v552, 4
      %v554 = vsel %vm248, %v552, %v553
      %556 = vst [vmem:[#allocation2 + $0xe4] sm:$0xf] %v554
      %v557 = vld [vmem:[%s222] sm:$0xff]
      %559 = vrot.lane.b32.xlu0 %v557, 127
      %v560 = vpop.permute.xlu0 %559
      %v561 = vrot.slane %v560, 4
      %v562 = vsel %vm248, %v560, %v561
      %564 = vst [vmem:[#allocation2 + $0xe8] sm:$0xf] %v562
      %v565 = vld [vmem:[%s228] sm:$0xff]
      %567 = vrot.lane.b32.xlu0 %v565, 127
      %v568 = vpop.permute.xlu0 %567
      %v569 = vrot.slane %v568, 4
      %v570 = vsel %vm248, %v568, %v569
      %572 = vst [vmem:[#allocation2 + $0xec] sm:$0xf] %v570
      %v573 = vld [vmem:[%s234] sm:$0xff]
      %575 = vrot.lane.b32.xlu0 %v573, 127
      %v576 = vpop.permute.xlu0 %575
      %v577 = vrot.slane %v576, 4
      %v578 = vsel %vm248, %v576, %v577
      %580 = vst [vmem:[#allocation2 + $0xf0] sm:$0xf] %v578
      %v581 = vld [vmem:[%s240] sm:$0xff]
      %583 = vrot.lane.b32.xlu0 %v581, 127
      %v584 = vpop.permute.xlu0 %583
      %v585 = vrot.slane %v584, 4
      %v586 = vsel %vm248, %v584, %v585
      %588 = vst [vmem:[#allocation2 + $0xf4] sm:$0xf] %v586
      %v589 = vld [vmem:[%s390] sm:$0xff]
      %591 = vrot.lane.b32.xlu0 %v589, 127
      %v592 = vpop.permute.xlu0 %591
      %v593 = vrot.slane %v592, 4
      %v594 = vsel %vm248, %v592, %v593
      %596 = vst [vmem:[#allocation2 + $0xf8] sm:$0xf] %v594
      %v597 = vld [vmem:[%s538] sm:$0xff]
      %599 = vrot.lane.b32.xlu0 %v597, 127
      %v600 = vpop.permute.xlu0 %599
      %v601 = vrot.slane %v600, 4
      %v602 = vsel %vm248, %v600, %v601
      %604 = vst [vmem:[#allocation2 + $0xfc] sm:$0xf] %v602
      %v605 = vld [vmem:[%s210] sm:$0xff]
      %607 = vrot.lane.b32.xlu0 %v605, 126
      %v608 = vpop.permute.xlu0 %607
      %v609 = vrot.slane %v608, 4
      %v610 = vsel %vm313, %v608, %v609
      %612 = vst [vmem:[#allocation2 + $0x100] sm:$0xf] %v610
      %v613 = vld [vmem:[%s216] sm:$0xff]
      %615 = vrot.lane.b32.xlu0 %v613, 126
      %v616 = vpop.permute.xlu0 %615
      %v617 = vrot.slane %v616, 4
      %v618 = vsel %vm313, %v616, %v617
      %620 = vst [vmem:[#allocation2 + $0x104] sm:$0xf] %v618
      %v621 = vld [vmem:[%s222] sm:$0xff]
      %623 = vrot.lane.b32.xlu0 %v621, 126
      %v624 = vpop.permute.xlu0 %623
      %v625 = vrot.slane %v624, 4
      %v626 = vsel %vm313, %v624, %v625
      %628 = vst [vmem:[#allocation2 + $0x108] sm:$0xf] %v626
      %v629 = vld [vmem:[%s228] sm:$0xff]
      %631 = vrot.lane.b32.xlu0 %v629, 126
      %v632 = vpop.permute.xlu0 %631
      %v633 = vrot.slane %v632, 4
      %v634 = vsel %vm313, %v632, %v633
      %636 = vst [vmem:[#allocation2 + $0x10c] sm:$0xf] %v634
      %v637 = vld [vmem:[%s234] sm:$0xff]
      %639 = vrot.lane.b32.xlu0 %v637, 126
      %v640 = vpop.permute.xlu0 %639
      %v641 = vrot.slane %v640, 4
      %v642 = vsel %vm313, %v640, %v641
      %644 = vst [vmem:[#allocation2 + $0x110] sm:$0xf] %v642
      %v645 = vld [vmem:[%s240] sm:$0xff]
      %647 = vrot.lane.b32.xlu0 %v645, 126
      %v648 = vpop.permute.xlu0 %647
      %v649 = vrot.slane %v648, 4
      %v650 = vsel %vm313, %v648, %v649
      %652 = vst [vmem:[#allocation2 + $0x114] sm:$0xf] %v650
      %v653 = vld [vmem:[%s390] sm:$0xff]
      %655 = vrot.lane.b32.xlu0 %v653, 126
      %v656 = vpop.permute.xlu0 %655
      %v657 = vrot.slane %v656, 4
      %v658 = vsel %vm313, %v656, %v657
      %660 = vst [vmem:[#allocation2 + $0x118] sm:$0xf] %v658
      %v661 = vld [vmem:[%s538] sm:$0xff]
      %663 = vrot.lane.b32.xlu0 %v661, 126
      %v664 = vpop.permute.xlu0 %663
      %v665 = vrot.slane %v664, 4
      %v666 = vsel %vm313, %v664, %v665
      %668 = vst [vmem:[#allocation2 + $0x11c] sm:$0xf] %v666
      %v669 = vld [vmem:[%s1] sm:$0xf]
      %v670 = vld [vmem:[#allocation2] sm:$0xff]
      %v671 = vld [vmem:[#allocation2 + $0x8] sm:$0xff]
      %v672 = vld [vmem:[#allocation2 + $0x10] sm:$0xff]
      %v673 = vld [vmem:[#allocation2 + $0x18] sm:$0xff]
      %v674 = vld [vmem:[#allocation2 + $0x20] sm:$0xff]
      %v675 = vld [vmem:[#allocation2 + $0x28] sm:$0xff]
      %v676 = vld [vmem:[#allocation2 + $0x30] sm:$0xff]
      %v677 = vld [vmem:[#allocation2 + $0x38] sm:$0xff]
      %v678 = vld [vmem:[#allocation2 + $0x40] sm:$0xff]
      %v679 = vld [vmem:[#allocation2 + $0x48] sm:$0xff]
      %v680 = vld [vmem:[#allocation2 + $0x50] sm:$0xff]
      %v681 = vld [vmem:[#allocation2 + $0x58] sm:$0xff]
      %v682 = vld [vmem:[#allocation2 + $0x60] sm:$0xff]
      %v683 = vld [vmem:[#allocation2 + $0x68] sm:$0xff]
      %v684 = vld [vmem:[#allocation2 + $0x70] sm:$0xff]
      %v685 = vld [vmem:[#allocation2 + $0x78] sm:$0xff]
      %v686 = vld [vmem:[#allocation2 + $0x80] sm:$0xff]
      %v687 = vld [vmem:[#allocation2 + $0x88] sm:$0xff]
      %v688 = vld [vmem:[#allocation2 + $0x90] sm:$0xff]
      %v689 = vld [vmem:[#allocation2 + $0x98] sm:$0xff]
      %v690 = vld [vmem:[#allocation2 + $0xa0] sm:$0xff]
      %v691 = vld [vmem:[#allocation2 + $0xa8] sm:$0xff]
      %v692 = vld [vmem:[#allocation2 + $0xb0] sm:$0xff]
      %v693 = vld [vmem:[#allocation2 + $0xb8] sm:$0xff]
      %v694 = vld [vmem:[#allocation2 + $0xc0] sm:$0xff]
      %v695 = vld [vmem:[#allocation2 + $0xc8] sm:$0xff]
      %v696 = vld [vmem:[#allocation2 + $0xd0] sm:$0xff]
      %v697 = vld [vmem:[#allocation2 + $0xd8] sm:$0xff]
      %v698 = vld [vmem:[#allocation2 + $0xe0] sm:$0xff]
      %v699 = vld [vmem:[#allocation2 + $0xe8] sm:$0xff]
      %v700 = vld [vmem:[#allocation2 + $0xf0] sm:$0xff]
      %v701 = vld [vmem:[#allocation2 + $0xf8] sm:$0xff]
      %v702 = vld [vmem:[#allocation2 + $0x100] sm:$0xff]
      %v703 = vld [vmem:[#allocation2 + $0x108] sm:$0xff]
      %v704 = vld [vmem:[#allocation2 + $0x110] sm:$0xff]
      %v705 = vld [vmem:[#allocation2 + $0x118] sm:$0xff]
      %v706 = vld [vmem:[%s2] sm:$0xff]
      %708 = vset.pattern.permute.xlu0 0
      %709 = vperm.xlu0 %708, %v706
      %v710 = vpop.permute.xlu0 %709
      %v748 = vunpack.c.l.b16 %v670
      %v749 = vunpack.c.h.b16 %v670
      %v750 = vunpack.c.l.b16 %v671
      %v751 = vunpack.c.h.b16 %v671
      %v752 = vunpack.c.l.b16 %v672
      %v753 = vunpack.c.h.b16 %v672
      %v754 = vunpack.c.l.b16 %v673
      %v755 = vunpack.c.h.b16 %v673
      %v756 = vunpack.c.l.b16 %v674
      %v757 = vunpack.c.h.b16 %v674
      %v758 = vunpack.c.l.b16 %v675
      %v759 = vunpack.c.h.b16 %v675
      %v760 = vunpack.c.l.b16 %v676
      %v761 = vunpack.c.h.b16 %v676
      %v762 = vunpack.c.l.b16 %v677
      %v763 = vunpack.c.h.b16 %v677
      %v764 = vunpack.c.l.b16 %v678
      %v765 = vunpack.c.h.b16 %v678
      %v766 = vunpack.c.l.b16 %v679
      %v767 = vunpack.c.h.b16 %v679
      %v768 = vunpack.c.l.b16 %v680
      %v769 = vunpack.c.h.b16 %v680
      %v770 = vunpack.c.l.b16 %v681
      %v771 = vunpack.c.h.b16 %v681
      %v772 = vunpack.c.l.b16 %v682
      %v773 = vunpack.c.h.b16 %v682
      %v774 = vunpack.c.l.b16 %v683
      %v775 = vunpack.c.h.b16 %v683
      %v776 = vunpack.c.l.b16 %v684
      %v777 = vunpack.c.h.b16 %v684
      %v778 = vunpack.c.l.b16 %v685
      %v779 = vunpack.c.h.b16 %v685
      %v780 = vunpack.c.l.b16 %v686
      %v781 = vunpack.c.h.b16 %v686
      %v782 = vunpack.c.l.b16 %v687
      %v783 = vunpack.c.h.b16 %v687
      %v784 = vunpack.c.l.b16 %v688
      %v785 = vunpack.c.h.b16 %v688
      %v786 = vunpack.c.l.b16 %v689
      %v787 = vunpack.c.h.b16 %v689
      %v788 = vunpack.c.l.b16 %v690
      %v789 = vunpack.c.h.b16 %v690
      %v790 = vunpack.c.l.b16 %v691
      %v791 = vunpack.c.h.b16 %v691
      %v792 = vunpack.c.l.b16 %v692
      %v793 = vunpack.c.h.b16 %v692
      %v794 = vunpack.c.l.b16 %v693
      %v795 = vunpack.c.h.b16 %v693
      %v796 = vunpack.c.l.b16 %v694
      %v797 = vunpack.c.h.b16 %v694
      %v798 = vunpack.c.l.b16 %v695
      %v799 = vunpack.c.h.b16 %v695
      %v800 = vunpack.c.l.b16 %v696
      %v801 = vunpack.c.h.b16 %v696
      %v802 = vunpack.c.l.b16 %v697
      %v803 = vunpack.c.h.b16 %v697
      %v804 = vunpack.c.l.b16 %v698
      %v805 = vunpack.c.h.b16 %v698
      %v806 = vunpack.c.l.b16 %v699
      %v807 = vunpack.c.h.b16 %v699
      %v808 = vunpack.c.l.b16 %v700
      %v809 = vunpack.c.h.b16 %v700
      %v810 = vunpack.c.l.b16 %v701
      %v811 = vunpack.c.h.b16 %v701
      %v812 = vunpack.c.l.b16 %v702
      %v813 = vunpack.c.h.b16 %v702
      %v814 = vunpack.c.l.b16 %v703
      %v815 = vunpack.c.h.b16 %v703
      %v816 = vunpack.c.l.b16 %v704
      %v817 = vunpack.c.h.b16 %v704
      %v818 = vunpack.c.l.b16 %v705
      %v819 = vunpack.c.h.b16 %v705
      %v820 = vpack.c.b16 %v756, %v748
      %v821 = vpack.c.b16 %v757, %v749
      %v822 = vpack.c.b16 %v758, %v750
      %v823 = vpack.c.b16 %v759, %v751
      %v824 = vpack.c.b16 %v760, %v752
      %v825 = vpack.c.b16 %v761, %v753
      %v826 = vpack.c.b16 %v762, %v754
      %v827 = vpack.c.b16 %v763, %v755
      %v828 = vpack.c.b16 %v772, %v764
      %v829 = vpack.c.b16 %v773, %v765
      %v830 = vpack.c.b16 %v774, %v766
      %v831 = vpack.c.b16 %v775, %v767
      %v832 = vpack.c.b16 %v776, %v768
      %v833 = vpack.c.b16 %v777, %v769
      %v834 = vpack.c.b16 %v778, %v770
      %v835 = vpack.c.b16 %v779, %v771
      %v836 = vpack.c.b16 %v788, %v780
      %v837 = vpack.c.b16 %v789, %v781
      %v838 = vpack.c.b16 %v790, %v782
      %v839 = vpack.c.b16 %v791, %v783
      %v840 = vpack.c.b16 %v792, %v784
      %v841 = vpack.c.b16 %v793, %v785
      %v842 = vpack.c.b16 %v794, %v786
      %v843 = vpack.c.b16 %v795, %v787
      %v844 = vpack.c.b16 %v804, %v796
      %v845 = vpack.c.b16 %v805, %v797
      %v846 = vpack.c.b16 %v806, %v798
      %v847 = vpack.c.b16 %v807, %v799
      %v848 = vpack.c.b16 %v808, %v800
      %v849 = vpack.c.b16 %v809, %v801
      %v850 = vpack.c.b16 %v810, %v802
      %v851 = vpack.c.b16 %v811, %v803
      %v852 = vpack.c.b16 %v812, %v812
      %v853 = vpack.c.b16 %v813, %v813
      %v854 = vpack.c.b16 %v814, %v814
      %v855 = vpack.c.b16 %v815, %v815
      %v856 = vpack.c.b16 %v816, %v816
      %v857 = vpack.c.b16 %v817, %v817
      %v858 = vpack.c.b16 %v818, %v818
      %v859 = vpack.c.b16 %v819, %v819
      %vm892 = vcmask 588800
      %v894 = vsel %vm892, %v669, 0
      %vm896 = vcmask 1043456
      %v898 = vsel %vm896, %v852, 0
      %v901 = vsel %vm896, %v853, 0
      %v904 = vsel %vm896, %v854, 0
      %v907 = vsel %vm896, %v855, 0
      %v910 = vsel %vm896, %v856, 0
      %v913 = vsel %vm896, %v857, 0
      %v916 = vsel %vm896, %v858, 0
      %v919 = vsel %vm896, %v859, 0
      %921 = vmatprep.subr.bf16.mxu0 %v821
      %922 = vmatpush1.bf16.msra.mxu0 %v820
      %923 = vmatprep.subr.bf16.mxu0 %v829
      %924 = vmatpush1.bf16.msra.mxu0 %v828
      %925 = vmatprep.subr.bf16.mxu0 %v837
      %926 = vmatpush1.bf16.msra.mxu0 %v836
      %927 = vmatprep.subr.bf16.mxu0 %v845
      %928 = vmatpush1.bf16.msra.mxu0 %v844
      %929 = vmatprep.subr.bf16.mxu0 %v901
      %930 = vmatpush1.bf16.msra.mxu0 %v898
      %931 = vmatprep.subr.bf16.mxu0 0
      %932 = vmatpush1.bf16.msra.mxu0 0
      %933 = vmatprep.subr.bf16.mxu0 0
      %934 = vmatpush1.bf16.msra.mxu0 0
      %935 = vmatprep.subr.bf16.mxu0 0
      %936 = vmatpush1.bf16.msra.mxu0 0
      %937 = vmatprep.subr.bf16.mxu0 0
      %938 = vmatpush1.bf16.msra.mxu0 0
      %939 = vmatprep.subr.bf16.mxu0 0
      %940 = vmatpush1.bf16.msra.mxu0 0
      %941 = vmatprep.subr.bf16.mxu0 0
      %942 = vmatpush1.bf16.msra.mxu0 0
      %943 = vmatprep.subr.bf16.mxu0 0
      %944 = vmatpush1.bf16.msra.mxu0 0
      %945 = vmatprep.subr.bf16.mxu0 0
      %946 = vmatpush1.bf16.msra.mxu0 0
      %947 = vmatprep.subr.bf16.mxu0 0
      %948 = vmatpush1.bf16.msra.mxu0 0
      %949 = vmatprep.subr.bf16.mxu0 0
      %950 = vmatpush1.bf16.msra.mxu0 0
      %951 = vmatprep.subr.bf16.mxu0 0
      %952 = vmatpush1.bf16.msra.mxu0 0
      %953 = vmatprep.mubr.bf16.mxu0 0
      %954 = vmatmul.mubr.bf16.gmra.mrb[0].mxu0 %v894
      %v955 = vpop.f32.mrb[0].mxu0
      %v956 = vadd.f32 %v710, %v955
      %v957 = vpop.f32.mrb[0].mxu0
      %v958 = vadd.f32 %v710, %v957
      %v959 = vpop.f32.mrb[0].mxu0
      %v960 = vpop.f32.mrb[0].mxu0
      %961 = vdwg.mxu0
      %962 = vmatprep.subr.bf16.mxu0 %v823
      %963 = vmatpush1.bf16.msra.mxu0 %v822
      %964 = vmatprep.subr.bf16.mxu0 %v831
      %965 = vmatpush1.bf16.msra.mxu0 %v830
      %966 = vmatprep.subr.bf16.mxu0 %v839
      %967 = vmatpush1.bf16.msra.mxu0 %v838
      %968 = vmatprep.subr.bf16.mxu0 %v847
      %969 = vmatpush1.bf16.msra.mxu0 %v846
      %970 = vmatprep.subr.bf16.mxu0 %v907
      %971 = vmatpush1.bf16.msra.mxu0 %v904
      %972 = vmatprep.subr.bf16.mxu0 0
      %973 = vmatpush1.bf16.msra.mxu0 0
      %974 = vmatprep.subr.bf16.mxu0 0
      %975 = vmatpush1.bf16.msra.mxu0 0
      %976 = vmatprep.subr.bf16.mxu0 0
      %977 = vmatpush1.bf16.msra.mxu0 0
      %978 = vmatprep.subr.bf16.mxu0 0
      %979 = vmatpush1.bf16.msra.mxu0 0
      %980 = vmatprep.subr.bf16.mxu0 0
      %981 = vmatpush1.bf16.msra.mxu0 0
      %982 = vmatprep.subr.bf16.mxu0 0
      %983 = vmatpush1.bf16.msra.mxu0 0
      %984 = vmatprep.subr.bf16.mxu0 0
      %985 = vmatpush1.bf16.msra.mxu0 0
      %986 = vmatprep.subr.bf16.mxu0 0
      %987 = vmatpush1.bf16.msra.mxu0 0
      %988 = vmatprep.subr.bf16.mxu0 0
      %989 = vmatpush1.bf16.msra.mxu0 0
      %990 = vmatprep.subr.bf16.mxu0 0
      %991 = vmatpush1.bf16.msra.mxu0 0
      %992 = vmatprep.subr.bf16.mxu0 0
      %993 = vmatpush1.bf16.msra.mxu0 0
      %994 = vmatprep.mubr.bf16.mxu0 0
      %995 = vmatmul.mubr.bf16.gmra.mrb[0].mxu0 %v894
      %v996 = vpop.f32.mrb[0].mxu0
      %v997 = vadd.f32 %v710, %v996
      %v998 = vpop.f32.mrb[0].mxu0
      %v999 = vadd.f32 %v710, %v998
      %v1000 = vpop.f32.mrb[0].mxu0
      %v1001 = vpop.f32.mrb[0].mxu0
      %1002 = vdwg.mxu0
      %1003 = vmatprep.subr.bf16.mxu0 %v825
      %1004 = vmatpush1.bf16.msra.mxu0 %v824
      %1005 = vmatprep.subr.bf16.mxu0 %v833
      %1006 = vmatpush1.bf16.msra.mxu0 %v832
      %1007 = vmatprep.subr.bf16.mxu0 %v841
      %1008 = vmatpush1.bf16.msra.mxu0 %v840
      %1009 = vmatprep.subr.bf16.mxu0 %v849
      %1010 = vmatpush1.bf16.msra.mxu0 %v848
      %1011 = vmatprep.subr.bf16.mxu0 %v913
      %1012 = vmatpush1.bf16.msra.mxu0 %v910
      %1013 = vmatprep.subr.bf16.mxu0 0
      %1014 = vmatpush1.bf16.msra.mxu0 0
      %1015 = vmatprep.subr.bf16.mxu0 0
      %1016 = vmatpush1.bf16.msra.mxu0 0
      %1017 = vmatprep.subr.bf16.mxu0 0
      %1018 = vmatpush1.bf16.msra.mxu0 0
      %1019 = vmatprep.subr.bf16.mxu0 0
      %1020 = vmatpush1.bf16.msra.mxu0 0
      %1021 = vmatprep.subr.bf16.mxu0 0
      %1022 = vmatpush1.bf16.msra.mxu0 0
      %1023 = vmatprep.subr.bf16.mxu0 0
      %1024 = vmatpush1.bf16.msra.mxu0 0
      %1025 = vmatprep.subr.bf16.mxu0 0
      %1026 = vmatpush1.bf16.msra.mxu0 0
      %1027 = vmatprep.subr.bf16.mxu0 0
      %1028 = vmatpush1.bf16.msra.mxu0 0
      %1029 = vmatprep.subr.bf16.mxu0 0
      %1030 = vmatpush1.bf16.msra.mxu0 0
      %1031 = vmatprep.subr.bf16.mxu0 0
      %1032 = vmatpush1.bf16.msra.mxu0 0
      %1033 = vmatprep.subr.bf16.mxu0 0
      %1034 = vmatpush1.bf16.msra.mxu0 0
      %1035 = vmatprep.mubr.bf16.mxu0 0
      %1036 = vmatmul.mubr.bf16.gmra.mrb[0].mxu0 %v894
      %v1037 = vpop.f32.mrb[0].mxu0
      %v1038 = vadd.f32 %v710, %v1037
      %v1039 = vpop.f32.mrb[0].mxu0
      %v1040 = vadd.f32 %v710, %v1039
      %v1041 = vpop.f32.mrb[0].mxu0
      %v1042 = vpop.f32.mrb[0].mxu0
      %1043 = vdwg.mxu0
      %1044 = vmatprep.subr.bf16.mxu0 %v827
      %1045 = vmatpush1.bf16.msra.mxu0 %v826
      %1046 = vmatprep.subr.bf16.mxu0 %v835
      %1047 = vmatpush1.bf16.msra.mxu0 %v834
      %1048 = vmatprep.subr.bf16.mxu0 %v843
      %1049 = vmatpush1.bf16.msra.mxu0 %v842
      %1050 = vmatprep.subr.bf16.mxu0 %v851
      %1051 = vmatpush1.bf16.msra.mxu0 %v850
      %1052 = vmatprep.subr.bf16.mxu0 %v919
      %1053 = vmatpush1.bf16.msra.mxu0 %v916
      %1054 = vmatprep.subr.bf16.mxu0 0
      %1055 = vmatpush1.bf16.msra.mxu0 0
      %1056 = vmatprep.subr.bf16.mxu0 0
      %1057 = vmatpush1.bf16.msra.mxu0 0
      %1058 = vmatprep.subr.bf16.mxu0 0
      %1059 = vmatpush1.bf16.msra.mxu0 0
      %1060 = vmatprep.subr.bf16.mxu0 0
      %1061 = vmatpush1.bf16.msra.mxu0 0
      %1062 = vmatprep.subr.bf16.mxu0 0
      %1063 = vmatpush1.bf16.msra.mxu0 0
      %1064 = vmatprep.subr.bf16.mxu0 0
      %1065 = vmatpush1.bf16.msra.mxu0 0
      %1066 = vmatprep.subr.bf16.mxu0 0
      %1067 = vmatpush1.bf16.msra.mxu0 0
      %1068 = vmatprep.subr.bf16.mxu0 0
      %1069 = vmatpush1.bf16.msra.mxu0 0
      %1070 = vmatprep.subr.bf16.mxu0 0
      %1071 = vmatpush1.bf16.msra.mxu0 0
      %1072 = vmatprep.subr.bf16.mxu0 0
      %1073 = vmatpush1.bf16.msra.mxu0 0
      %1074 = vmatprep.subr.bf16.mxu0 0
      %1075 = vmatpush1.bf16.msra.mxu0 0
      %1076 = vmatprep.mubr.bf16.mxu0 0
      %1077 = vmatmul.mubr.bf16.gmra.mrb[0].mxu0 %v894
      %v1078 = vpop.f32.mrb[0].mxu0
      %v1079 = vadd.f32 %v710, %v1078
      %v1080 = vpop.f32.mrb[0].mxu0
      %v1081 = vadd.f32 %v710, %v1080
      %v1082 = vpop.f32.mrb[0].mxu0
      %v1083 = vpop.f32.mrb[0].mxu0
      %1084 = vdwg.mxu0
      %1085 = vst [vmem:[%s192] sm:$0xff] %v956
      %1086 = vst [vmem:[%s192 + $0x8] sm:$0xff] %v958
      %1087 = vst [vmem:[%s192 + $0x10] sm:$0xff] %v997
      %1088 = vst [vmem:[%s192 + $0x18] sm:$0xff] %v999
      %1089 = vst [vmem:[%s192 + $0x20] sm:$0xff] %v1038
      %1090 = vst [vmem:[%s192 + $0x28] sm:$0xff] %v1040
      %1091 = vst [vmem:[%s192 + $0x30] sm:$0xff] %v1079
      %1092 = vst [vmem:[%s192 + $0x38] sm:$0xff] %v1081
      %s1093 = smul.u32 8, %s19
      %p1094 = scmp.lt.s32.totalorder %s18, 1
      %s1095 = scalar_select %p1094, %s18, 1
      %p1096 = scmp.lt.s32.totalorder %s1093, 15
      %s1097 = scalar_select %p1096, %s1093, 15
      %s1098 = smul.addr %s1095, 16
      %s1099 = sadd.s32 %s1097, %s1098
      %s1100 = smul.addr %s1099, 8
      %s1101 = scalar_lea.vmem %s3, %s1100
      // Predicated region
      $region33: #{conv_layer_forward.1} parent=31 // pred_check
        %p1102 = pneg %p114
      $region34: #{conv_layer_forward.1} parent=31 // pred_check_branch
        %1104 = sbr.rel (%p1102) target = $region36
      $region35: #{conv_layer_forward.1} parent=31 // pred_region
        %s1105 = smul.u32 8, %s19
      $region36: #{conv_layer_forward.1} parent=31 // pred_fallthru
        _
    $region32: #{conv_layer_forward.1} parent=5 // pred_fallthru
      _
    %p1106 = scmp.le.s32.totalorder 2, %s9
    // Predicated region
    $region37: #{conv_layer_forward.1} parent=5 // pred_check
      %p1107 = pneg %p1106
    $region38: #{conv_layer_forward.1} parent=5 // pred_check_branch
      %1109 = sbr.rel (%p1107) target = $region40
    $region39: #{conv_layer_forward.1} parent=5 // pred_region
      %s1110 = ssub.s32 %s9, 2
      // Predicated region
      $region41: #{conv_layer_forward.1} parent=39 // pred_check
        %p1111 = pneg %p120
      $region42: #{conv_layer_forward.1} parent=39 // pred_check_branch
        %1113 = sbr.rel (%p1111) target = $region44
      $region43: #{conv_layer_forward.1} parent=39 // pred_region
        %s1114 = smul.u32 8, %s21
        %p1115 = scmp.lt.s32.totalorder %s20, 1
        %s1116 = scalar_select %p1115, %s20, 1
        %p1117 = scmp.lt.s32.totalorder %s1114, 15
        %s1118 = scalar_select %p1117, %s1114, 15
        %s1119 = smul.addr %s1116, 16
        %s1120 = sadd.s32 %s1118, %s1119
        %s1121 = smul.addr %s1120, 8
        %s1122 = scalar_lea.vmem %s3, %s1121
      $region44: #{conv_layer_forward.1} parent=39 // pred_fallthru
        _
    $region40: #{conv_layer_forward.1} parent=5 // pred_fallthru
      _
  $region6: #{conv_layer_forward.1} parent=0 // loop_footer
    %s13 = sadd.s32 1, %s9
  $region7: #{conv_layer_forward.1} parent=0 // loop_footer_branch
    %8 = sbr.rel target = $region3
  $region8: #{conv_layer_forward.1} parent=0 // loop_exit
    _

</llo_original>
